<compile_context>
chip_gen: v7x
topology: tpu7x:2x2x1
jax: 0.10.0
libtpu: 0.0.40
codegen_flags: <defaults>
</compile_context>

<pallas_src>
import functools
import math
import numpy as np
import jax
import jax.numpy as jnp
from jax import lax
from jax.experimental import pallas as pl
from jax.experimental.pallas import tpu as pltpu

# Geometry constants of the TorchProteinLibrary reduced backbone model
# (reconstructed from the CUDA kernel; the python module only dispatches to it).
PI_C = 3.14159           # deliberately truncated to match the CUDA constants
KAPPA1 = PI_C - 1.9391   # bond-angle term paired with phi   (N  -> next frame)
KAPPA2 = PI_C - 2.061    # bond-angle term paired with psi   (CA -> next frame)
KAPPA3 = PI_C - 2.1186   # bond-angle term paired with omega (C  -> next frame)
OMEGACIS = -3.1318       # fixed omega dihedral
R_CA_C = 1.525
R_C_N = 1.330
R_N_CA = 1.460


# ----------------------------- small symbolic helpers -----------------------------
# Transforms are kept as (rot, t): rot is a 3x3 nested list, t a length-3 list.  Each
# entry is either a Python float constant or a (Bt, Lpad) f32 plane (batch on sublanes,
# residues on lanes).  _mul/_add constant-fold exact 0/1 so the many structural zeros of
# M(alpha, beta, R) never reach the VPU.

def _mul(a, b):
    if isinstance(a, float):
        if a == 0.0:
            return 0.0
        if a == 1.0:
            return b
    if isinstance(b, float):
        if b == 0.0:
            return 0.0
        if b == 1.0:
            return a
    return a * b


def _add(a, b):
    if isinstance(a, float) and a == 0.0:
        return b
    if isinstance(b, float) and b == 0.0:
        return a
    return a + b


def _make_M(ca, sa, cb, sb, r):
    """Affine (rot, t) form of M(alpha, beta, R) used by the reduced backbone model."""
    rot = [[ca, -_mul(sa, cb), _mul(sa, sb)],
           [sa, _mul(ca, cb), -_mul(ca, sb)],
           [0.0, sb, cb]]
    t = [_mul(r, ca), _mul(r, sa), 0.0]
    return rot, t


def _compose(A, B):
    """A @ B for homogeneous transforms: C.rot = A.rot @ B.rot, C.t = A.rot @ B.t + A.t."""
    a_rot, a_t = A
    b_rot, b_t = B
    c_rot = [[_add(_add(_mul(a_rot[i][0], b_rot[0][j]),
                        _mul(a_rot[i][1], b_rot[1][j])),
                   _mul(a_rot[i][2], b_rot[2][j]))
              for j in range(3)] for i in range(3)]
    c_t = [_add(_add(_add(_mul(a_rot[i][0], b_t[0]),
                          _mul(a_rot[i][1], b_t[1])),
                     _mul(a_rot[i][2], b_t[2])),
                a_t[i]) for i in range(3)]
    return c_rot, c_t


# ------------------------------------- kernel -------------------------------------
def _a2b_kernel(lens_ref, phi_ref, psi_ref, out_ref, *, scan_len):
    """lens_ref: (Bt,1) i32; phi/psi: (Bt,Lpad) f32; out_ref: (9,Bt,Lpad) f32.

    scan_len is the static number of real residues (<= Lpad); the prefix-scan depth is
    ceil(log2(scan_len)), independent of the 128-lane padding.
    """
    bt, lpad = phi_ref.shape
    f32 = jnp.float32

    phi = phi_ref[...]
    psi = psi_ref[...]
    lens = lens_ref[...]                                    # (bt, 1) int32
    lane = lax.broadcasted_iota(jnp.int32, (bt, lpad), 1)   # residue index on lanes

    cb1, sb1 = math.cos(KAPPA1), math.sin(KAPPA1)
    cb2, sb2 = math.cos(KAPPA2), math.sin(KAPPA2)
    cb3, sb3 = math.cos(KAPPA3), math.sin(KAPPA3)
    ca_o, sa_o = math.cos(OMEGACIS), math.sin(OMEGACIS)

    # Per-atom step transforms, vectorized over (batch sublanes, residue lanes).
    # The very first atom of every chain uses R = 0 (it sits at the origin frame).
    r_n = jnp.where(lane == 0, f32(0.0), f32(R_C_N))
    b_n = _make_M(jnp.cos(phi), jnp.sin(phi), cb1, sb1, r_n)
    b_ca = _make_M(jnp.cos(psi), jnp.sin(psi), cb2, sb2, R_N_CA)
    b_c = _make_M(ca_o, sa_o, cb3, sb3, R_CA_C)             # constant (fixed omega)

    # Composite per-residue transform T_k = B_N(k) @ B_CA(k) @ B_C.
    t_rot, t_t = _compose(_compose(b_n, b_ca), b_c)

    def to_plane(v):
        if isinstance(v, float):
            return jnp.full((bt, lpad), v, dtype=f32)
        return v.astype(f32)

    P = ([[to_plane(t_rot[i][j]) for j in range(3)] for i in range(3)],
         [to_plane(t_t[i]) for i in range(3)])

    def shift_right(M, d):
        """M_k -> M_{k-d} along the residue (lane) axis; identity fill for k < d."""
        rot, t = M
        # Build the two pad constants once per distance and reuse across all 12 planes
        # (JAX does not CSE broadcast_in_dim).
        zpad = jnp.zeros((bt, d), dtype=f32)
        opad = jnp.ones((bt, d), dtype=f32)

        def sh(x, pad):
            return jnp.concatenate([pad, x[:, : lpad - d]], axis=1)

        rot2 = [[sh(rot[i][j], opad if i == j else zpad) for j in range(3)]
                for i in range(3)]
        t2 = [sh(t[i], zpad) for i in range(3)]
        return rot2, t2

    # Log-depth inclusive prefix product over residues: P_k = T_0 @ ... @ T_k.
    # ceil(log2(scan_len)) steps cover every valid residue; padded lanes beyond the
    # real residue count are garbage but masked out of the stores below.
    d = 1
    while d < scan_len:
        P = _compose(shift_right(P, d), P)
        d *= 2

    # Exclusive prefix E_k = P_{k-1} (identity at k = 0) recovers the N / CA atoms:
    #   N_k  = (E_k @ B_N(k)).t
    #   CA_k = (E_k @ B_N(k) @ B_CA(k)).t
    #   C_k  = P_k.t
    E = shift_right(P, 1)
    m1_rot, m1_t = _compose(E, b_n)
    _, bca_t = b_ca
    pos_n = m1_t
    pos_ca = [_add(_add(_add(_mul(m1_rot[i][0], bca_t[0]),
                             _mul(m1_rot[i][1], bca_t[1])),
                        _mul(m1_rot[i][2], bca_t[2])),
                   m1_t[i]) for i in range(3)]
    pos_c = P[1]

    # Single length mask + 9 lane-dense bulk stores: out[c, b, k], c = 3*atom + xyz.
    valid = lane < lens
    coords = [to_plane(v) for v in (list(pos_n) + list(pos_ca) + list(pos_c))]
    for c in range(9):
        out_ref[c, :, :] = jnp.where(valid, coords[c], 0.0).astype(f32)


# ------------------------------------ wrapper ------------------------------------
def _round_up(x, m):
    return ((x + m - 1) // m) * m


def angles2backbone(angles, angles_length, *, batch_tile=8):
    """angles: (B, 2, L); angles_length: (B,) int. Returns (B, 9*max(length)) float32."""
    angles = jnp.asarray(angles, jnp.float32)
    B, two, L = angles.shape
    assert two == 2, angles.shape
    lens = jnp.asarray(angles_length, jnp.int32)

    # torch sizes the output by max(angles_length); we only use that (host) value to
    # slice the final result.  Kernel shapes are keyed by the static L rounded up to a
    # 128-lane bucket, so no per-max-length recompiles and all stores are lane-aligned.
    l_max = int(jax.device_get(jnp.max(lens)))
    l_pad = _round_up(max(L, 1), 128)
    bt = batch_tile
    b_pad = _round_up(B, bt)

    phi = jnp.pad(angles[:, 0, :], ((0, b_pad - B), (0, l_pad - L)))
    psi = jnp.pad(angles[:, 1, :], ((0, b_pad - B), (0, l_pad - L)))
    lens_p = jnp.pad(lens.reshape(B, 1), ((0, b_pad - B), (0, 0)))

    out = pl.pallas_call(
        functools.partial(_a2b_kernel, scan_len=max(int(L), 1)),
        out_shape=jax.ShapeDtypeStruct((9, b_pad, l_pad), jnp.float32),
        grid=(b_pad // bt,),
        in_specs=[
            pl.BlockSpec((bt, 1), lambda i: (i, 0)),        # lengths
            pl.BlockSpec((bt, l_pad), lambda i: (i, 0)),    # phi
            pl.BlockSpec((bt, l_pad), lambda i: (i, 0)),    # psi
        ],
        out_specs=pl.BlockSpec((9, bt, l_pad), lambda i: (0, i, 0)),
        compiler_params=pltpu.CompilerParams(
            dimension_semantics=("parallel",)),  # batch tiles independent (2 TCs on v7x)
    )(lens_p, phi, psi)

    # (9, Bp, Lpad) -> (Bp, Lpad, 9) -> torch-flat (b, 9*k + 3*atom + xyz).
    out = jnp.transpose(out, (1, 2, 0)).reshape(b_pad, 9 * l_pad)
    return out[:B, : 9 * l_max]


# ----------------------------- numpy reference (spec) -----------------------------
def _reference(angles, lengths):
    """Pure numpy reference of the same reduced-model forward."""
    angles = np.asarray(angles, dtype=np.float64)
    lengths = np.asarray(lengths)
    B = angles.shape[0]
    Lmax = int(lengths.max())
    A_max = 3 * Lmax
    out = np.zeros((B, 3 * A_max), dtype=np.float64)

    def M(alpha, beta, R):
        ca, sa = np.cos(alpha), np.sin(alpha)
        cb, sb = np.cos(beta), np.sin(beta)
        return np.array([[ca, -sa * cb, sa * sb, R * ca],
                         [sa, ca * cb, -ca * sb, R * sa],
                         [0.0, sb, cb, 0.0],
                         [0.0, 0.0, 0.0, 1.0]])

    for b in range(B):
        n_at = 3 * int(lengths[b])
        phi, psi = angles[b, 0], angles[b, 1]
        A = np.eye(4)
        for i in range(n_at):
            k, m = i // 3, i % 3
            if m == 0:
                Bm = M(phi[k], KAPPA1, 0.0 if i == 0 else R_C_N)
            elif m == 1:
                Bm = M(psi[k], KAPPA2, R_N_CA)
            else:
                Bm = M(OMEGACIS, KAPPA3, R_CA_C)
            A = A @ Bm
            out[b, 3 * i:3 * i + 3] = A[:3, 3]
    return out


if __name__ == "__main__":
    key = jax.random.PRNGKey(0)
    B, L = 2, 8
    angles = jax.random.uniform(key, (B, 2, L), minval=-math.pi, maxval=math.pi,
                                dtype=jnp.float32)
    lengths = jnp.array([8, 5], dtype=jnp.int32)

    out = jax.block_until_ready(angles2backbone(angles, lengths))

    ref = _reference(np.asarray(angles), np.asarray(lengths))
    assert out.shape == ref.shape, (out.shape, ref.shape)
    np.testing.assert_allclose(np.asarray(out), ref, rtol=1e-3, atol=1e-3)
    # TODO(synk): backward pass (gradInput / dr_dangle) and the ctx.A (16 per atom)
    # transform buffer are not materialized; forward coordinates only.
    print("KERNEL_OK")
</pallas_src>

<mosaic_0001>
module attributes {stable_mosaic.version = 11 : i64} {
  func.func @_a2b_kernel(%arg0: i32, %arg1: memref<8x1xi32, #tpu.memory_space<vmem>>, %arg2: memref<8x128xf32, #tpu.memory_space<vmem>>, %arg3: memref<8x128xf32, #tpu.memory_space<vmem>>, %arg4: memref<9x8x128xf32, #tpu.memory_space<vmem>>) attributes {dimension_semantics = [#tpu.dimension_semantics<parallel>], iteration_bounds = array<i64: 1>, scalar_prefetch = 0 : i64, scratch_operands = 0 : i64, tpu.core_type = #tpu.core_type<tc>, window_params = [{transform_indices = @transform_0, window_bounds = array<i64: 8, 1>}, {transform_indices = @transform_1, window_bounds = array<i64: 8, 128>}, {transform_indices = @transform_2, window_bounds = array<i64: 8, 128>}, {transform_indices = @transform_3, window_bounds = array<i64: 9, 8, 128>}]} {
    %c0 = arith.constant 0 : index
    %c0_0 = arith.constant 0 : index
    %0 = vector.load %arg2[%c0, %c0_0] : memref<8x128xf32, #tpu.memory_space<vmem>>, vector<8x128xf32>
    %c0_1 = arith.constant 0 : index
    %c0_2 = arith.constant 0 : index
    %1 = vector.load %arg3[%c0_1, %c0_2] : memref<8x128xf32, #tpu.memory_space<vmem>>, vector<8x128xf32>
    %c0_3 = arith.constant 0 : index
    %c0_4 = arith.constant 0 : index
    %2 = vector.load %arg1[%c0_3, %c0_4] : memref<8x1xi32, #tpu.memory_space<vmem>>, vector<8x1xi32>
    %3 = tpu.iota {dimensions = array<i32: 1>} : vector<8x128xi32>
    %c0_i32 = arith.constant 0 : i32
    %4 = vector.broadcast %c0_i32 : i32 to vector<8x128xi32>
    %5 = arith.cmpi eq, %3, %4 : vector<8x128xi32>
    %cst = arith.constant 0.000000e+00 : f32
    %cst_5 = arith.constant 1.330000e+00 : f32
    %6 = vector.broadcast %cst : f32 to vector<8x128xf32>
    %7 = vector.broadcast %cst_5 : f32 to vector<8x128xf32>
    %8 = arith.select %5, %6, %7 : vector<8x128xi1>, vector<8x128xf32>
    %9 = math.cos %0 : vector<8x128xf32>
    %10 = math.sin %0 : vector<8x128xf32>
    %cst_6 = arith.constant 0.360035866 : f32
    %11 = vector.broadcast %cst_6 : f32 to vector<8x128xf32>
    %12 = arith.mulf %10, %11 : vector<8x128xf32>
    %cst_7 = arith.constant 0.000000e+00 : f32
    %13 = vector.broadcast %cst_7 : f32 to vector<8x128xf32>
    %14 = arith.subf %13, %12 : vector<8x128xf32>
    %cst_8 = arith.constant 0.932938456 : f32
    %15 = vector.broadcast %cst_8 : f32 to vector<8x128xf32>
    %16 = arith.mulf %10, %15 : vector<8x128xf32>
    %cst_9 = arith.constant 0.360035866 : f32
    %17 = vector.broadcast %cst_9 : f32 to vector<8x128xf32>
    %18 = arith.mulf %9, %17 : vector<8x128xf32>
    %cst_10 = arith.constant 0.932938456 : f32
    %19 = vector.broadcast %cst_10 : f32 to vector<8x128xf32>
    %20 = arith.mulf %9, %19 : vector<8x128xf32>
    %cst_11 = arith.constant 0.000000e+00 : f32
    %21 = vector.broadcast %cst_11 : f32 to vector<8x128xf32>
    %22 = arith.subf %21, %20 : vector<8x128xf32>
    %23 = arith.mulf %8, %9 : vector<8x128xf32>
    %24 = arith.mulf %8, %10 : vector<8x128xf32>
    %25 = math.cos %1 : vector<8x128xf32>
    %26 = math.sin %1 : vector<8x128xf32>
    %cst_12 = arith.constant 0.47080794 : f32
    %27 = vector.broadcast %cst_12 : f32 to vector<8x128xf32>
    %28 = arith.mulf %26, %27 : vector<8x128xf32>
    %cst_13 = arith.constant 0.000000e+00 : f32
    %29 = vector.broadcast %cst_13 : f32 to vector<8x128xf32>
    %30 = arith.subf %29, %28 : vector<8x128xf32>
    %cst_14 = arith.constant 0.882235765 : f32
    %31 = vector.broadcast %cst_14 : f32 to vector<8x128xf32>
    %32 = arith.mulf %26, %31 : vector<8x128xf32>
    %cst_15 = arith.constant 0.47080794 : f32
    %33 = vector.broadcast %cst_15 : f32 to vector<8x128xf32>
    %34 = arith.mulf %25, %33 : vector<8x128xf32>
    %cst_16 = arith.constant 0.882235765 : f32
    %35 = vector.broadcast %cst_16 : f32 to vector<8x128xf32>
    %36 = arith.mulf %25, %35 : vector<8x128xf32>
    %cst_17 = arith.constant 0.000000e+00 : f32
    %37 = vector.broadcast %cst_17 : f32 to vector<8x128xf32>
    %38 = arith.subf %37, %36 : vector<8x128xf32>
    %cst_18 = arith.constant 1.460000e+00 : f32
    %39 = vector.broadcast %cst_18 : f32 to vector<8x128xf32>
    %40 = arith.mulf %39, %25 : vector<8x128xf32>
    %cst_19 = arith.constant 1.460000e+00 : f32
    %41 = vector.broadcast %cst_19 : f32 to vector<8x128xf32>
    %42 = arith.mulf %41, %26 : vector<8x128xf32>
    %43 = arith.mulf %9, %25 : vector<8x128xf32>
    %44 = arith.mulf %14, %26 : vector<8x128xf32>
    %45 = arith.addf %43, %44 : vector<8x128xf32>
    %46 = arith.mulf %9, %30 : vector<8x128xf32>
    %47 = arith.mulf %14, %34 : vector<8x128xf32>
    %48 = arith.addf %46, %47 : vector<8x128xf32>
    %cst_20 = arith.constant 0.882235765 : f32
    %49 = vector.broadcast %cst_20 : f32 to vector<8x128xf32>
    %50 = arith.mulf %16, %49 : vector<8x128xf32>
    %51 = arith.addf %48, %50 : vector<8x128xf32>
    %52 = arith.mulf %9, %32 : vector<8x128xf32>
    %53 = arith.mulf %14, %38 : vector<8x128xf32>
    %54 = arith.addf %52, %53 : vector<8x128xf32>
    %cst_21 = arith.constant 0.47080794 : f32
    %55 = vector.broadcast %cst_21 : f32 to vector<8x128xf32>
    %56 = arith.mulf %16, %55 : vector<8x128xf32>
    %57 = arith.addf %54, %56 : vector<8x128xf32>
    %58 = arith.mulf %10, %25 : vector<8x128xf32>
    %59 = arith.mulf %18, %26 : vector<8x128xf32>
    %60 = arith.addf %58, %59 : vector<8x128xf32>
    %61 = arith.mulf %10, %30 : vector<8x128xf32>
    %62 = arith.mulf %18, %34 : vector<8x128xf32>
    %63 = arith.addf %61, %62 : vector<8x128xf32>
    %cst_22 = arith.constant 0.882235765 : f32
    %64 = vector.broadcast %cst_22 : f32 to vector<8x128xf32>
    %65 = arith.mulf %22, %64 : vector<8x128xf32>
    %66 = arith.addf %63, %65 : vector<8x128xf32>
    %67 = arith.mulf %10, %32 : vector<8x128xf32>
    %68 = arith.mulf %18, %38 : vector<8x128xf32>
    %69 = arith.addf %67, %68 : vector<8x128xf32>
    %cst_23 = arith.constant 0.47080794 : f32
    %70 = vector.broadcast %cst_23 : f32 to vector<8x128xf32>
    %71 = arith.mulf %22, %70 : vector<8x128xf32>
    %72 = arith.addf %69, %71 : vector<8x128xf32>
    %cst_24 = arith.constant 0.932938456 : f32
    %73 = vector.broadcast %cst_24 : f32 to vector<8x128xf32>
    %74 = arith.mulf %73, %26 : vector<8x128xf32>
    %cst_25 = arith.constant 0.932938456 : f32
    %75 = vector.broadcast %cst_25 : f32 to vector<8x128xf32>
    %76 = arith.mulf %75, %34 : vector<8x128xf32>
    %cst_26 = arith.constant 0.31763649 : f32
    %77 = vector.broadcast %cst_26 : f32 to vector<8x128xf32>
    %78 = arith.addf %76, %77 : vector<8x128xf32>
    %cst_27 = arith.constant 0.932938456 : f32
    %79 = vector.broadcast %cst_27 : f32 to vector<8x128xf32>
    %80 = arith.mulf %79, %38 : vector<8x128xf32>
    %cst_28 = arith.constant 0.169507742 : f32
    %81 = vector.broadcast %cst_28 : f32 to vector<8x128xf32>
    %82 = arith.addf %80, %81 : vector<8x128xf32>
    %83 = arith.mulf %9, %40 : vector<8x128xf32>
    %84 = arith.mulf %14, %42 : vector<8x128xf32>
    %85 = arith.addf %83, %84 : vector<8x128xf32>
    %86 = arith.addf %85, %23 : vector<8x128xf32>
    %87 = arith.mulf %10, %40 : vector<8x128xf32>
    %88 = arith.mulf %18, %42 : vector<8x128xf32>
    %89 = arith.addf %87, %88 : vector<8x128xf32>
    %90 = arith.addf %89, %24 : vector<8x128xf32>
    %cst_29 = arith.constant 0.932938456 : f32
    %91 = vector.broadcast %cst_29 : f32 to vector<8x128xf32>
    %92 = arith.mulf %91, %42 : vector<8x128xf32>
    %cst_30 = arith.constant -0.999952077 : f32
    %93 = vector.broadcast %cst_30 : f32 to vector<8x128xf32>
    %94 = arith.mulf %45, %93 : vector<8x128xf32>
    %cst_31 = arith.constant -0.00979249738 : f32
    %95 = vector.broadcast %cst_31 : f32 to vector<8x128xf32>
    %96 = arith.mulf %51, %95 : vector<8x128xf32>
    %97 = arith.addf %94, %96 : vector<8x128xf32>
    %cst_32 = arith.constant 0.00510008726 : f32
    %98 = vector.broadcast %cst_32 : f32 to vector<8x128xf32>
    %99 = arith.mulf %45, %98 : vector<8x128xf32>
    %cst_33 = arith.constant -0.520790815 : f32
    %100 = vector.broadcast %cst_33 : f32 to vector<8x128xf32>
    %101 = arith.mulf %51, %100 : vector<8x128xf32>
    %102 = arith.addf %99, %101 : vector<8x128xf32>
    %cst_34 = arith.constant 0.853669047 : f32
    %103 = vector.broadcast %cst_34 : f32 to vector<8x128xf32>
    %104 = arith.mulf %57, %103 : vector<8x128xf32>
    %105 = arith.addf %102, %104 : vector<8x128xf32>
    %cst_35 = arith.constant -0.00835955236 : f32
    %106 = vector.broadcast %cst_35 : f32 to vector<8x128xf32>
    %107 = arith.mulf %45, %106 : vector<8x128xf32>
    %cst_36 = arith.constant 0.853628159 : f32
    %108 = vector.broadcast %cst_36 : f32 to vector<8x128xf32>
    %109 = arith.mulf %51, %108 : vector<8x128xf32>
    %110 = arith.addf %107, %109 : vector<8x128xf32>
    %cst_37 = arith.constant 0.52081579 : f32
    %111 = vector.broadcast %cst_37 : f32 to vector<8x128xf32>
    %112 = arith.mulf %57, %111 : vector<8x128xf32>
    %113 = arith.addf %110, %112 : vector<8x128xf32>
    %cst_38 = arith.constant -0.999952077 : f32
    %114 = vector.broadcast %cst_38 : f32 to vector<8x128xf32>
    %115 = arith.mulf %60, %114 : vector<8x128xf32>
    %cst_39 = arith.constant -0.00979249738 : f32
    %116 = vector.broadcast %cst_39 : f32 to vector<8x128xf32>
    %117 = arith.mulf %66, %116 : vector<8x128xf32>
    %118 = arith.addf %115, %117 : vector<8x128xf32>
    %cst_40 = arith.constant 0.00510008726 : f32
    %119 = vector.broadcast %cst_40 : f32 to vector<8x128xf32>
    %120 = arith.mulf %60, %119 : vector<8x128xf32>
    %cst_41 = arith.constant -0.520790815 : f32
    %121 = vector.broadcast %cst_41 : f32 to vector<8x128xf32>
    %122 = arith.mulf %66, %121 : vector<8x128xf32>
    %123 = arith.addf %120, %122 : vector<8x128xf32>
    %cst_42 = arith.constant 0.853669047 : f32
    %124 = vector.broadcast %cst_42 : f32 to vector<8x128xf32>
    %125 = arith.mulf %72, %124 : vector<8x128xf32>
    %126 = arith.addf %123, %125 : vector<8x128xf32>
    %cst_43 = arith.constant -0.00835955236 : f32
    %127 = vector.broadcast %cst_43 : f32 to vector<8x128xf32>
    %128 = arith.mulf %60, %127 : vector<8x128xf32>
    %cst_44 = arith.constant 0.853628159 : f32
    %129 = vector.broadcast %cst_44 : f32 to vector<8x128xf32>
    %130 = arith.mulf %66, %129 : vector<8x128xf32>
    %131 = arith.addf %128, %130 : vector<8x128xf32>
    %cst_45 = arith.constant 0.52081579 : f32
    %132 = vector.broadcast %cst_45 : f32 to vector<8x128xf32>
    %133 = arith.mulf %72, %132 : vector<8x128xf32>
    %134 = arith.addf %131, %133 : vector<8x128xf32>
    %cst_46 = arith.constant -0.999952077 : f32
    %135 = vector.broadcast %cst_46 : f32 to vector<8x128xf32>
    %136 = arith.mulf %74, %135 : vector<8x128xf32>
    %cst_47 = arith.constant -0.00979249738 : f32
    %137 = vector.broadcast %cst_47 : f32 to vector<8x128xf32>
    %138 = arith.mulf %78, %137 : vector<8x128xf32>
    %139 = arith.addf %136, %138 : vector<8x128xf32>
    %cst_48 = arith.constant 0.00510008726 : f32
    %140 = vector.broadcast %cst_48 : f32 to vector<8x128xf32>
    %141 = arith.mulf %74, %140 : vector<8x128xf32>
    %cst_49 = arith.constant -0.520790815 : f32
    %142 = vector.broadcast %cst_49 : f32 to vector<8x128xf32>
    %143 = arith.mulf %78, %142 : vector<8x128xf32>
    %144 = arith.addf %141, %143 : vector<8x128xf32>
    %cst_50 = arith.constant 0.853669047 : f32
    %145 = vector.broadcast %cst_50 : f32 to vector<8x128xf32>
    %146 = arith.mulf %82, %145 : vector<8x128xf32>
    %147 = arith.addf %144, %146 : vector<8x128xf32>
    %cst_51 = arith.constant -0.00835955236 : f32
    %148 = vector.broadcast %cst_51 : f32 to vector<8x128xf32>
    %149 = arith.mulf %74, %148 : vector<8x128xf32>
    %cst_52 = arith.constant 0.853628159 : f32
    %150 = vector.broadcast %cst_52 : f32 to vector<8x128xf32>
    %151 = arith.mulf %78, %150 : vector<8x128xf32>
    %152 = arith.addf %149, %151 : vector<8x128xf32>
    %cst_53 = arith.constant 0.52081579 : f32
    %153 = vector.broadcast %cst_53 : f32 to vector<8x128xf32>
    %154 = arith.mulf %82, %153 : vector<8x128xf32>
    %155 = arith.addf %152, %154 : vector<8x128xf32>
    %cst_54 = arith.constant -1.5249269 : f32
    %156 = vector.broadcast %cst_54 : f32 to vector<8x128xf32>
    %157 = arith.mulf %45, %156 : vector<8x128xf32>
    %cst_55 = arith.constant -0.0149335582 : f32
    %158 = vector.broadcast %cst_55 : f32 to vector<8x128xf32>
    %159 = arith.mulf %51, %158 : vector<8x128xf32>
    %160 = arith.addf %157, %159 : vector<8x128xf32>
    %161 = arith.addf %160, %86 : vector<8x128xf32>
    %cst_56 = arith.constant -1.5249269 : f32
    %162 = vector.broadcast %cst_56 : f32 to vector<8x128xf32>
    %163 = arith.mulf %60, %162 : vector<8x128xf32>
    %cst_57 = arith.constant -0.0149335582 : f32
    %164 = vector.broadcast %cst_57 : f32 to vector<8x128xf32>
    %165 = arith.mulf %66, %164 : vector<8x128xf32>
    %166 = arith.addf %163, %165 : vector<8x128xf32>
    %167 = arith.addf %166, %90 : vector<8x128xf32>
    %cst_58 = arith.constant -1.5249269 : f32
    %168 = vector.broadcast %cst_58 : f32 to vector<8x128xf32>
    %169 = arith.mulf %74, %168 : vector<8x128xf32>
    %cst_59 = arith.constant -0.0149335582 : f32
    %170 = vector.broadcast %cst_59 : f32 to vector<8x128xf32>
    %171 = arith.mulf %78, %170 : vector<8x128xf32>
    %172 = arith.addf %169, %171 : vector<8x128xf32>
    %173 = arith.addf %172, %92 : vector<8x128xf32>
    %cst_60 = arith.constant 0.000000e+00 : f32
    %174 = vector.broadcast %cst_60 : f32 to vector<8x1xf32>
    %cst_61 = arith.constant 1.000000e+00 : f32
    %175 = vector.broadcast %cst_61 : f32 to vector<8x1xf32>
    %176 = vector.extract_strided_slice %97 {offsets = [0, 0], sizes = [8, 127], strides = [1, 1]} : vector<8x128xf32> to vector<8x127xf32>
    %177 = tpu.concatenate %175, %176 in 1 : vector<8x1xf32>, vector<8x127xf32> -> vector<8x128xf32>
    %178 = vector.extract_strided_slice %105 {offsets = [0, 0], sizes = [8, 127], strides = [1, 1]} : vector<8x128xf32> to vector<8x127xf32>
    %179 = tpu.concatenate %174, %178 in 1 : vector<8x1xf32>, vector<8x127xf32> -> vector<8x128xf32>
    %180 = vector.extract_strided_slice %113 {offsets = [0, 0], sizes = [8, 127], strides = [1, 1]} : vector<8x128xf32> to vector<8x127xf32>
    %181 = tpu.concatenate %174, %180 in 1 : vector<8x1xf32>, vector<8x127xf32> -> vector<8x128xf32>
    %182 = vector.extract_strided_slice %118 {offsets = [0, 0], sizes = [8, 127], strides = [1, 1]} : vector<8x128xf32> to vector<8x127xf32>
    %183 = tpu.concatenate %174, %182 in 1 : vector<8x1xf32>, vector<8x127xf32> -> vector<8x128xf32>
    %184 = vector.extract_strided_slice %126 {offsets = [0, 0], sizes = [8, 127], strides = [1, 1]} : vector<8x128xf32> to vector<8x127xf32>
    %185 = tpu.concatenate %175, %184 in 1 : vector<8x1xf32>, vector<8x127xf32> -> vector<8x128xf32>
    %186 = vector.extract_strided_slice %134 {offsets = [0, 0], sizes = [8, 127], strides = [1, 1]} : vector<8x128xf32> to vector<8x127xf32>
    %187 = tpu.concatenate %174, %186 in 1 : vector<8x1xf32>, vector<8x127xf32> -> vector<8x128xf32>
    %188 = vector.extract_strided_slice %139 {offsets = [0, 0], sizes = [8, 127], strides = [1, 1]} : vector<8x128xf32> to vector<8x127xf32>
    %189 = tpu.concatenate %174, %188 in 1 : vector<8x1xf32>, vector<8x127xf32> -> vector<8x128xf32>
    %190 = vector.extract_strided_slice %147 {offsets = [0, 0], sizes = [8, 127], strides = [1, 1]} : vector<8x128xf32> to vector<8x127xf32>
    %191 = tpu.concatenate %174, %190 in 1 : vector<8x1xf32>, vector<8x127xf32> -> vector<8x128xf32>
    %192 = vector.extract_strided_slice %155 {offsets = [0, 0], sizes = [8, 127], strides = [1, 1]} : vector<8x128xf32> to vector<8x127xf32>
    %193 = tpu.concatenate %175, %192 in 1 : vector<8x1xf32>, vector<8x127xf32> -> vector<8x128xf32>
    %194 = vector.extract_strided_slice %161 {offsets = [0, 0], sizes = [8, 127], strides = [1, 1]} : vector<8x128xf32> to vector<8x127xf32>
    %195 = tpu.concatenate %174, %194 in 1 : vector<8x1xf32>, vector<8x127xf32> -> vector<8x128xf32>
    %196 = vector.extract_strided_slice %167 {offsets = [0, 0], sizes = [8, 127], strides = [1, 1]} : vector<8x128xf32> to vector<8x127xf32>
    %197 = tpu.concatenate %174, %196 in 1 : vector<8x1xf32>, vector<8x127xf32> -> vector<8x128xf32>
    %198 = vector.extract_strided_slice %173 {offsets = [0, 0], sizes = [8, 127], strides = [1, 1]} : vector<8x128xf32> to vector<8x127xf32>
    %199 = tpu.concatenate %174, %198 in 1 : vector<8x1xf32>, vector<8x127xf32> -> vector<8x128xf32>
    %200 = arith.mulf %177, %97 : vector<8x128xf32>
    %201 = arith.mulf %179, %118 : vector<8x128xf32>
    %202 = arith.addf %200, %201 : vector<8x128xf32>
    %203 = arith.mulf %181, %139 : vector<8x128xf32>
    %204 = arith.addf %202, %203 : vector<8x128xf32>
    %205 = arith.mulf %177, %105 : vector<8x128xf32>
    %206 = arith.mulf %179, %126 : vector<8x128xf32>
    %207 = arith.addf %205, %206 : vector<8x128xf32>
    %208 = arith.mulf %181, %147 : vector<8x128xf32>
    %209 = arith.addf %207, %208 : vector<8x128xf32>
    %210 = arith.mulf %177, %113 : vector<8x128xf32>
    %211 = arith.mulf %179, %134 : vector<8x128xf32>
    %212 = arith.addf %210, %211 : vector<8x128xf32>
    %213 = arith.mulf %181, %155 : vector<8x128xf32>
    %214 = arith.addf %212, %213 : vector<8x128xf32>
    %215 = arith.mulf %183, %97 : vector<8x128xf32>
    %216 = arith.mulf %185, %118 : vector<8x128xf32>
    %217 = arith.addf %215, %216 : vector<8x128xf32>
    %218 = arith.mulf %187, %139 : vector<8x128xf32>
    %219 = arith.addf %217, %218 : vector<8x128xf32>
    %220 = arith.mulf %183, %105 : vector<8x128xf32>
    %221 = arith.mulf %185, %126 : vector<8x128xf32>
    %222 = arith.addf %220, %221 : vector<8x128xf32>
    %223 = arith.mulf %187, %147 : vector<8x128xf32>
    %224 = arith.addf %222, %223 : vector<8x128xf32>
    %225 = arith.mulf %183, %113 : vector<8x128xf32>
    %226 = arith.mulf %185, %134 : vector<8x128xf32>
    %227 = arith.addf %225, %226 : vector<8x128xf32>
    %228 = arith.mulf %187, %155 : vector<8x128xf32>
    %229 = arith.addf %227, %228 : vector<8x128xf32>
    %230 = arith.mulf %189, %97 : vector<8x128xf32>
    %231 = arith.mulf %191, %118 : vector<8x128xf32>
    %232 = arith.addf %230, %231 : vector<8x128xf32>
    %233 = arith.mulf %193, %139 : vector<8x128xf32>
    %234 = arith.addf %232, %233 : vector<8x128xf32>
    %235 = arith.mulf %189, %105 : vector<8x128xf32>
    %236 = arith.mulf %191, %126 : vector<8x128xf32>
    %237 = arith.addf %235, %236 : vector<8x128xf32>
    %238 = arith.mulf %193, %147 : vector<8x128xf32>
    %239 = arith.addf %237, %238 : vector<8x128xf32>
    %240 = arith.mulf %189, %113 : vector<8x128xf32>
    %241 = arith.mulf %191, %134 : vector<8x128xf32>
    %242 = arith.addf %240, %241 : vector<8x128xf32>
    %243 = arith.mulf %193, %155 : vector<8x128xf32>
    %244 = arith.addf %242, %243 : vector<8x128xf32>
    %245 = arith.mulf %177, %161 : vector<8x128xf32>
    %246 = arith.mulf %179, %167 : vector<8x128xf32>
    %247 = arith.addf %245, %246 : vector<8x128xf32>
    %248 = arith.mulf %181, %173 : vector<8x128xf32>
    %249 = arith.addf %247, %248 : vector<8x128xf32>
    %250 = arith.addf %249, %195 : vector<8x128xf32>
    %251 = arith.mulf %183, %161 : vector<8x128xf32>
    %252 = arith.mulf %185, %167 : vector<8x128xf32>
    %253 = arith.addf %251, %252 : vector<8x128xf32>
    %254 = arith.mulf %187, %173 : vector<8x128xf32>
    %255 = arith.addf %253, %254 : vector<8x128xf32>
    %256 = arith.addf %255, %197 : vector<8x128xf32>
    %257 = arith.mulf %189, %161 : vector<8x128xf32>
    %258 = arith.mulf %191, %167 : vector<8x128xf32>
    %259 = arith.addf %257, %258 : vector<8x128xf32>
    %260 = arith.mulf %193, %173 : vector<8x128xf32>
    %261 = arith.addf %259, %260 : vector<8x128xf32>
    %262 = arith.addf %261, %199 : vector<8x128xf32>
    %cst_62 = arith.constant 0.000000e+00 : f32
    %263 = vector.broadcast %cst_62 : f32 to vector<8x2xf32>
    %cst_63 = arith.constant 1.000000e+00 : f32
    %264 = vector.broadcast %cst_63 : f32 to vector<8x2xf32>
    %265 = vector.extract_strided_slice %204 {offsets = [0, 0], sizes = [8, 126], strides = [1, 1]} : vector<8x128xf32> to vector<8x126xf32>
    %266 = tpu.concatenate %264, %265 in 1 : vector<8x2xf32>, vector<8x126xf32> -> vector<8x128xf32>
    %267 = vector.extract_strided_slice %209 {offsets = [0, 0], sizes = [8, 126], strides = [1, 1]} : vector<8x128xf32> to vector<8x126xf32>
    %268 = tpu.concatenate %263, %267 in 1 : vector<8x2xf32>, vector<8x126xf32> -> vector<8x128xf32>
    %269 = vector.extract_strided_slice %214 {offsets = [0, 0], sizes = [8, 126], strides = [1, 1]} : vector<8x128xf32> to vector<8x126xf32>
    %270 = tpu.concatenate %263, %269 in 1 : vector<8x2xf32>, vector<8x126xf32> -> vector<8x128xf32>
    %271 = vector.extract_strided_slice %219 {offsets = [0, 0], sizes = [8, 126], strides = [1, 1]} : vector<8x128xf32> to vector<8x126xf32>
    %272 = tpu.concatenate %263, %271 in 1 : vector<8x2xf32>, vector<8x126xf32> -> vector<8x128xf32>
    %273 = vector.extract_strided_slice %224 {offsets = [0, 0], sizes = [8, 126], strides = [1, 1]} : vector<8x128xf32> to vector<8x126xf32>
    %274 = tpu.concatenate %264, %273 in 1 : vector<8x2xf32>, vector<8x126xf32> -> vector<8x128xf32>
    %275 = vector.extract_strided_slice %229 {offsets = [0, 0], sizes = [8, 126], strides = [1, 1]} : vector<8x128xf32> to vector<8x126xf32>
    %276 = tpu.concatenate %263, %275 in 1 : vector<8x2xf32>, vector<8x126xf32> -> vector<8x128xf32>
    %277 = vector.extract_strided_slice %234 {offsets = [0, 0], sizes = [8, 126], strides = [1, 1]} : vector<8x128xf32> to vector<8x126xf32>
    %278 = tpu.concatenate %263, %277 in 1 : vector<8x2xf32>, vector<8x126xf32> -> vector<8x128xf32>
    %279 = vector.extract_strided_slice %239 {offsets = [0, 0], sizes = [8, 126], strides = [1, 1]} : vector<8x128xf32> to vector<8x126xf32>
    %280 = tpu.concatenate %263, %279 in 1 : vector<8x2xf32>, vector<8x126xf32> -> vector<8x128xf32>
    %281 = vector.extract_strided_slice %244 {offsets = [0, 0], sizes = [8, 126], strides = [1, 1]} : vector<8x128xf32> to vector<8x126xf32>
    %282 = tpu.concatenate %264, %281 in 1 : vector<8x2xf32>, vector<8x126xf32> -> vector<8x128xf32>
    %283 = vector.extract_strided_slice %250 {offsets = [0, 0], sizes = [8, 126], strides = [1, 1]} : vector<8x128xf32> to vector<8x126xf32>
    %284 = tpu.concatenate %263, %283 in 1 : vector<8x2xf32>, vector<8x126xf32> -> vector<8x128xf32>
    %285 = vector.extract_strided_slice %256 {offsets = [0, 0], sizes = [8, 126], strides = [1, 1]} : vector<8x128xf32> to vector<8x126xf32>
    %286 = tpu.concatenate %263, %285 in 1 : vector<8x2xf32>, vector<8x126xf32> -> vector<8x128xf32>
    %287 = vector.extract_strided_slice %262 {offsets = [0, 0], sizes = [8, 126], strides = [1, 1]} : vector<8x128xf32> to vector<8x126xf32>
    %288 = tpu.concatenate %263, %287 in 1 : vector<8x2xf32>, vector<8x126xf32> -> vector<8x128xf32>
    %289 = arith.mulf %266, %204 : vector<8x128xf32>
    %290 = arith.mulf %268, %219 : vector<8x128xf32>
    %291 = arith.addf %289, %290 : vector<8x128xf32>
    %292 = arith.mulf %270, %234 : vector<8x128xf32>
    %293 = arith.addf %291, %292 : vector<8x128xf32>
    %294 = arith.mulf %266, %209 : vector<8x128xf32>
    %295 = arith.mulf %268, %224 : vector<8x128xf32>
    %296 = arith.addf %294, %295 : vector<8x128xf32>
    %297 = arith.mulf %270, %239 : vector<8x128xf32>
    %298 = arith.addf %296, %297 : vector<8x128xf32>
    %299 = arith.mulf %266, %214 : vector<8x128xf32>
    %300 = arith.mulf %268, %229 : vector<8x128xf32>
    %301 = arith.addf %299, %300 : vector<8x128xf32>
    %302 = arith.mulf %270, %244 : vector<8x128xf32>
    %303 = arith.addf %301, %302 : vector<8x128xf32>
    %304 = arith.mulf %272, %204 : vector<8x128xf32>
    %305 = arith.mulf %274, %219 : vector<8x128xf32>
    %306 = arith.addf %304, %305 : vector<8x128xf32>
    %307 = arith.mulf %276, %234 : vector<8x128xf32>
    %308 = arith.addf %306, %307 : vector<8x128xf32>
    %309 = arith.mulf %272, %209 : vector<8x128xf32>
    %310 = arith.mulf %274, %224 : vector<8x128xf32>
    %311 = arith.addf %309, %310 : vector<8x128xf32>
    %312 = arith.mulf %276, %239 : vector<8x128xf32>
    %313 = arith.addf %311, %312 : vector<8x128xf32>
    %314 = arith.mulf %272, %214 : vector<8x128xf32>
    %315 = arith.mulf %274, %229 : vector<8x128xf32>
    %316 = arith.addf %314, %315 : vector<8x128xf32>
    %317 = arith.mulf %276, %244 : vector<8x128xf32>
    %318 = arith.addf %316, %317 : vector<8x128xf32>
    %319 = arith.mulf %278, %204 : vector<8x128xf32>
    %320 = arith.mulf %280, %219 : vector<8x128xf32>
    %321 = arith.addf %319, %320 : vector<8x128xf32>
    %322 = arith.mulf %282, %234 : vector<8x128xf32>
    %323 = arith.addf %321, %322 : vector<8x128xf32>
    %324 = arith.mulf %278, %209 : vector<8x128xf32>
    %325 = arith.mulf %280, %224 : vector<8x128xf32>
    %326 = arith.addf %324, %325 : vector<8x128xf32>
    %327 = arith.mulf %282, %239 : vector<8x128xf32>
    %328 = arith.addf %326, %327 : vector<8x128xf32>
    %329 = arith.mulf %278, %214 : vector<8x128xf32>
    %330 = arith.mulf %280, %229 : vector<8x128xf32>
    %331 = arith.addf %329, %330 : vector<8x128xf32>
    %332 = arith.mulf %282, %244 : vector<8x128xf32>
    %333 = arith.addf %331, %332 : vector<8x128xf32>
    %334 = arith.mulf %266, %250 : vector<8x128xf32>
    %335 = arith.mulf %268, %256 : vector<8x128xf32>
    %336 = arith.addf %334, %335 : vector<8x128xf32>
    %337 = arith.mulf %270, %262 : vector<8x128xf32>
    %338 = arith.addf %336, %337 : vector<8x128xf32>
    %339 = arith.addf %338, %284 : vector<8x128xf32>
    %340 = arith.mulf %272, %250 : vector<8x128xf32>
    %341 = arith.mulf %274, %256 : vector<8x128xf32>
    %342 = arith.addf %340, %341 : vector<8x128xf32>
    %343 = arith.mulf %276, %262 : vector<8x128xf32>
    %344 = arith.addf %342, %343 : vector<8x128xf32>
    %345 = arith.addf %344, %286 : vector<8x128xf32>
    %346 = arith.mulf %278, %250 : vector<8x128xf32>
    %347 = arith.mulf %280, %256 : vector<8x128xf32>
    %348 = arith.addf %346, %347 : vector<8x128xf32>
    %349 = arith.mulf %282, %262 : vector<8x128xf32>
    %350 = arith.addf %348, %349 : vector<8x128xf32>
    %351 = arith.addf %350, %288 : vector<8x128xf32>
    %cst_64 = arith.constant 0.000000e+00 : f32
    %352 = vector.broadcast %cst_64 : f32 to vector<8x4xf32>
    %cst_65 = arith.constant 1.000000e+00 : f32
    %353 = vector.broadcast %cst_65 : f32 to vector<8x4xf32>
    %354 = vector.extract_strided_slice %293 {offsets = [0, 0], sizes = [8, 124], strides = [1, 1]} : vector<8x128xf32> to vector<8x124xf32>
    %355 = tpu.concatenate %353, %354 in 1 : vector<8x4xf32>, vector<8x124xf32> -> vector<8x128xf32>
    %356 = vector.extract_strided_slice %298 {offsets = [0, 0], sizes = [8, 124], strides = [1, 1]} : vector<8x128xf32> to vector<8x124xf32>
    %357 = tpu.concatenate %352, %356 in 1 : vector<8x4xf32>, vector<8x124xf32> -> vector<8x128xf32>
    %358 = vector.extract_strided_slice %303 {offsets = [0, 0], sizes = [8, 124], strides = [1, 1]} : vector<8x128xf32> to vector<8x124xf32>
    %359 = tpu.concatenate %352, %358 in 1 : vector<8x4xf32>, vector<8x124xf32> -> vector<8x128xf32>
    %360 = vector.extract_strided_slice %308 {offsets = [0, 0], sizes = [8, 124], strides = [1, 1]} : vector<8x128xf32> to vector<8x124xf32>
    %361 = tpu.concatenate %352, %360 in 1 : vector<8x4xf32>, vector<8x124xf32> -> vector<8x128xf32>
    %362 = vector.extract_strided_slice %313 {offsets = [0, 0], sizes = [8, 124], strides = [1, 1]} : vector<8x128xf32> to vector<8x124xf32>
    %363 = tpu.concatenate %353, %362 in 1 : vector<8x4xf32>, vector<8x124xf32> -> vector<8x128xf32>
    %364 = vector.extract_strided_slice %318 {offsets = [0, 0], sizes = [8, 124], strides = [1, 1]} : vector<8x128xf32> to vector<8x124xf32>
    %365 = tpu.concatenate %352, %364 in 1 : vector<8x4xf32>, vector<8x124xf32> -> vector<8x128xf32>
    %366 = vector.extract_strided_slice %323 {offsets = [0, 0], sizes = [8, 124], strides = [1, 1]} : vector<8x128xf32> to vector<8x124xf32>
    %367 = tpu.concatenate %352, %366 in 1 : vector<8x4xf32>, vector<8x124xf32> -> vector<8x128xf32>
    %368 = vector.extract_strided_slice %328 {offsets = [0, 0], sizes = [8, 124], strides = [1, 1]} : vector<8x128xf32> to vector<8x124xf32>
    %369 = tpu.concatenate %352, %368 in 1 : vector<8x4xf32>, vector<8x124xf32> -> vector<8x128xf32>
    %370 = vector.extract_strided_slice %333 {offsets = [0, 0], sizes = [8, 124], strides = [1, 1]} : vector<8x128xf32> to vector<8x124xf32>
    %371 = tpu.concatenate %353, %370 in 1 : vector<8x4xf32>, vector<8x124xf32> -> vector<8x128xf32>
    %372 = vector.extract_strided_slice %339 {offsets = [0, 0], sizes = [8, 124], strides = [1, 1]} : vector<8x128xf32> to vector<8x124xf32>
    %373 = tpu.concatenate %352, %372 in 1 : vector<8x4xf32>, vector<8x124xf32> -> vector<8x128xf32>
    %374 = vector.extract_strided_slice %345 {offsets = [0, 0], sizes = [8, 124], strides = [1, 1]} : vector<8x128xf32> to vector<8x124xf32>
    %375 = tpu.concatenate %352, %374 in 1 : vector<8x4xf32>, vector<8x124xf32> -> vector<8x128xf32>
    %376 = vector.extract_strided_slice %351 {offsets = [0, 0], sizes = [8, 124], strides = [1, 1]} : vector<8x128xf32> to vector<8x124xf32>
    %377 = tpu.concatenate %352, %376 in 1 : vector<8x4xf32>, vector<8x124xf32> -> vector<8x128xf32>
    %378 = arith.mulf %355, %293 : vector<8x128xf32>
    %379 = arith.mulf %357, %308 : vector<8x128xf32>
    %380 = arith.addf %378, %379 : vector<8x128xf32>
    %381 = arith.mulf %359, %323 : vector<8x128xf32>
    %382 = arith.addf %380, %381 : vector<8x128xf32>
    %383 = arith.mulf %355, %298 : vector<8x128xf32>
    %384 = arith.mulf %357, %313 : vector<8x128xf32>
    %385 = arith.addf %383, %384 : vector<8x128xf32>
    %386 = arith.mulf %359, %328 : vector<8x128xf32>
    %387 = arith.addf %385, %386 : vector<8x128xf32>
    %388 = arith.mulf %355, %303 : vector<8x128xf32>
    %389 = arith.mulf %357, %318 : vector<8x128xf32>
    %390 = arith.addf %388, %389 : vector<8x128xf32>
    %391 = arith.mulf %359, %333 : vector<8x128xf32>
    %392 = arith.addf %390, %391 : vector<8x128xf32>
    %393 = arith.mulf %361, %293 : vector<8x128xf32>
    %394 = arith.mulf %363, %308 : vector<8x128xf32>
    %395 = arith.addf %393, %394 : vector<8x128xf32>
    %396 = arith.mulf %365, %323 : vector<8x128xf32>
    %397 = arith.addf %395, %396 : vector<8x128xf32>
    %398 = arith.mulf %361, %298 : vector<8x128xf32>
    %399 = arith.mulf %363, %313 : vector<8x128xf32>
    %400 = arith.addf %398, %399 : vector<8x128xf32>
    %401 = arith.mulf %365, %328 : vector<8x128xf32>
    %402 = arith.addf %400, %401 : vector<8x128xf32>
    %403 = arith.mulf %361, %303 : vector<8x128xf32>
    %404 = arith.mulf %363, %318 : vector<8x128xf32>
    %405 = arith.addf %403, %404 : vector<8x128xf32>
    %406 = arith.mulf %365, %333 : vector<8x128xf32>
    %407 = arith.addf %405, %406 : vector<8x128xf32>
    %408 = arith.mulf %367, %293 : vector<8x128xf32>
    %409 = arith.mulf %369, %308 : vector<8x128xf32>
    %410 = arith.addf %408, %409 : vector<8x128xf32>
    %411 = arith.mulf %371, %323 : vector<8x128xf32>
    %412 = arith.addf %410, %411 : vector<8x128xf32>
    %413 = arith.mulf %367, %298 : vector<8x128xf32>
    %414 = arith.mulf %369, %313 : vector<8x128xf32>
    %415 = arith.addf %413, %414 : vector<8x128xf32>
    %416 = arith.mulf %371, %328 : vector<8x128xf32>
    %417 = arith.addf %415, %416 : vector<8x128xf32>
    %418 = arith.mulf %367, %303 : vector<8x128xf32>
    %419 = arith.mulf %369, %318 : vector<8x128xf32>
    %420 = arith.addf %418, %419 : vector<8x128xf32>
    %421 = arith.mulf %371, %333 : vector<8x128xf32>
    %422 = arith.addf %420, %421 : vector<8x128xf32>
    %423 = arith.mulf %355, %339 : vector<8x128xf32>
    %424 = arith.mulf %357, %345 : vector<8x128xf32>
    %425 = arith.addf %423, %424 : vector<8x128xf32>
    %426 = arith.mulf %359, %351 : vector<8x128xf32>
    %427 = arith.addf %425, %426 : vector<8x128xf32>
    %428 = arith.addf %427, %373 : vector<8x128xf32>
    %429 = arith.mulf %361, %339 : vector<8x128xf32>
    %430 = arith.mulf %363, %345 : vector<8x128xf32>
    %431 = arith.addf %429, %430 : vector<8x128xf32>
    %432 = arith.mulf %365, %351 : vector<8x128xf32>
    %433 = arith.addf %431, %432 : vector<8x128xf32>
    %434 = arith.addf %433, %375 : vector<8x128xf32>
    %435 = arith.mulf %367, %339 : vector<8x128xf32>
    %436 = arith.mulf %369, %345 : vector<8x128xf32>
    %437 = arith.addf %435, %436 : vector<8x128xf32>
    %438 = arith.mulf %371, %351 : vector<8x128xf32>
    %439 = arith.addf %437, %438 : vector<8x128xf32>
    %440 = arith.addf %439, %377 : vector<8x128xf32>
    %cst_66 = arith.constant 0.000000e+00 : f32
    %441 = vector.broadcast %cst_66 : f32 to vector<8x1xf32>
    %cst_67 = arith.constant 1.000000e+00 : f32
    %442 = vector.broadcast %cst_67 : f32 to vector<8x1xf32>
    %443 = vector.extract_strided_slice %382 {offsets = [0, 0], sizes = [8, 127], strides = [1, 1]} : vector<8x128xf32> to vector<8x127xf32>
    %444 = tpu.concatenate %442, %443 in 1 : vector<8x1xf32>, vector<8x127xf32> -> vector<8x128xf32>
    %445 = vector.extract_strided_slice %387 {offsets = [0, 0], sizes = [8, 127], strides = [1, 1]} : vector<8x128xf32> to vector<8x127xf32>
    %446 = tpu.concatenate %441, %445 in 1 : vector<8x1xf32>, vector<8x127xf32> -> vector<8x128xf32>
    %447 = vector.extract_strided_slice %392 {offsets = [0, 0], sizes = [8, 127], strides = [1, 1]} : vector<8x128xf32> to vector<8x127xf32>
    %448 = tpu.concatenate %441, %447 in 1 : vector<8x1xf32>, vector<8x127xf32> -> vector<8x128xf32>
    %449 = vector.extract_strided_slice %397 {offsets = [0, 0], sizes = [8, 127], strides = [1, 1]} : vector<8x128xf32> to vector<8x127xf32>
    %450 = tpu.concatenate %441, %449 in 1 : vector<8x1xf32>, vector<8x127xf32> -> vector<8x128xf32>
    %451 = vector.extract_strided_slice %402 {offsets = [0, 0], sizes = [8, 127], strides = [1, 1]} : vector<8x128xf32> to vector<8x127xf32>
    %452 = tpu.concatenate %442, %451 in 1 : vector<8x1xf32>, vector<8x127xf32> -> vector<8x128xf32>
    %453 = vector.extract_strided_slice %407 {offsets = [0, 0], sizes = [8, 127], strides = [1, 1]} : vector<8x128xf32> to vector<8x127xf32>
    %454 = tpu.concatenate %441, %453 in 1 : vector<8x1xf32>, vector<8x127xf32> -> vector<8x128xf32>
    %455 = vector.extract_strided_slice %412 {offsets = [0, 0], sizes = [8, 127], strides = [1, 1]} : vector<8x128xf32> to vector<8x127xf32>
    %456 = tpu.concatenate %441, %455 in 1 : vector<8x1xf32>, vector<8x127xf32> -> vector<8x128xf32>
    %457 = vector.extract_strided_slice %417 {offsets = [0, 0], sizes = [8, 127], strides = [1, 1]} : vector<8x128xf32> to vector<8x127xf32>
    %458 = tpu.concatenate %441, %457 in 1 : vector<8x1xf32>, vector<8x127xf32> -> vector<8x128xf32>
    %459 = vector.extract_strided_slice %422 {offsets = [0, 0], sizes = [8, 127], strides = [1, 1]} : vector<8x128xf32> to vector<8x127xf32>
    %460 = tpu.concatenate %442, %459 in 1 : vector<8x1xf32>, vector<8x127xf32> -> vector<8x128xf32>
    %461 = vector.extract_strided_slice %428 {offsets = [0, 0], sizes = [8, 127], strides = [1, 1]} : vector<8x128xf32> to vector<8x127xf32>
    %462 = tpu.concatenate %441, %461 in 1 : vector<8x1xf32>, vector<8x127xf32> -> vector<8x128xf32>
    %463 = vector.extract_strided_slice %434 {offsets = [0, 0], sizes = [8, 127], strides = [1, 1]} : vector<8x128xf32> to vector<8x127xf32>
    %464 = tpu.concatenate %441, %463 in 1 : vector<8x1xf32>, vector<8x127xf32> -> vector<8x128xf32>
    %465 = vector.extract_strided_slice %440 {offsets = [0, 0], sizes = [8, 127], strides = [1, 1]} : vector<8x128xf32> to vector<8x127xf32>
    %466 = tpu.concatenate %441, %465 in 1 : vector<8x1xf32>, vector<8x127xf32> -> vector<8x128xf32>
    %467 = arith.mulf %444, %9 : vector<8x128xf32>
    %468 = arith.mulf %446, %10 : vector<8x128xf32>
    %469 = arith.addf %467, %468 : vector<8x128xf32>
    %470 = arith.mulf %444, %14 : vector<8x128xf32>
    %471 = arith.mulf %446, %18 : vector<8x128xf32>
    %472 = arith.addf %470, %471 : vector<8x128xf32>
    %cst_68 = arith.constant 0.932938456 : f32
    %473 = vector.broadcast %cst_68 : f32 to vector<8x128xf32>
    %474 = arith.mulf %448, %473 : vector<8x128xf32>
    %475 = arith.addf %472, %474 : vector<8x128xf32>
    %476 = arith.mulf %450, %9 : vector<8x128xf32>
    %477 = arith.mulf %452, %10 : vector<8x128xf32>
    %478 = arith.addf %476, %477 : vector<8x128xf32>
    %479 = arith.mulf %450, %14 : vector<8x128xf32>
    %480 = arith.mulf %452, %18 : vector<8x128xf32>
    %481 = arith.addf %479, %480 : vector<8x128xf32>
    %cst_69 = arith.constant 0.932938456 : f32
    %482 = vector.broadcast %cst_69 : f32 to vector<8x128xf32>
    %483 = arith.mulf %454, %482 : vector<8x128xf32>
    %484 = arith.addf %481, %483 : vector<8x128xf32>
    %485 = arith.mulf %456, %9 : vector<8x128xf32>
    %486 = arith.mulf %458, %10 : vector<8x128xf32>
    %487 = arith.addf %485, %486 : vector<8x128xf32>
    %488 = arith.mulf %456, %14 : vector<8x128xf32>
    %489 = arith.mulf %458, %18 : vector<8x128xf32>
    %490 = arith.addf %488, %489 : vector<8x128xf32>
    %cst_70 = arith.constant 0.932938456 : f32
    %491 = vector.broadcast %cst_70 : f32 to vector<8x128xf32>
    %492 = arith.mulf %460, %491 : vector<8x128xf32>
    %493 = arith.addf %490, %492 : vector<8x128xf32>
    %494 = arith.mulf %444, %23 : vector<8x128xf32>
    %495 = arith.mulf %446, %24 : vector<8x128xf32>
    %496 = arith.addf %494, %495 : vector<8x128xf32>
    %497 = arith.addf %496, %462 : vector<8x128xf32>
    %498 = arith.mulf %450, %23 : vector<8x128xf32>
    %499 = arith.mulf %452, %24 : vector<8x128xf32>
    %500 = arith.addf %498, %499 : vector<8x128xf32>
    %501 = arith.addf %500, %464 : vector<8x128xf32>
    %502 = arith.mulf %456, %23 : vector<8x128xf32>
    %503 = arith.mulf %458, %24 : vector<8x128xf32>
    %504 = arith.addf %502, %503 : vector<8x128xf32>
    %505 = arith.addf %504, %466 : vector<8x128xf32>
    %506 = arith.mulf %469, %40 : vector<8x128xf32>
    %507 = arith.mulf %475, %42 : vector<8x128xf32>
    %508 = arith.addf %506, %507 : vector<8x128xf32>
    %509 = arith.addf %508, %497 : vector<8x128xf32>
    %510 = arith.mulf %478, %40 : vector<8x128xf32>
    %511 = arith.mulf %484, %42 : vector<8x128xf32>
    %512 = arith.addf %510, %511 : vector<8x128xf32>
    %513 = arith.addf %512, %501 : vector<8x128xf32>
    %514 = arith.mulf %487, %40 : vector<8x128xf32>
    %515 = arith.mulf %493, %42 : vector<8x128xf32>
    %516 = arith.addf %514, %515 : vector<8x128xf32>
    %517 = arith.addf %516, %505 : vector<8x128xf32>
    %518 = vector.broadcast %2 : vector<8x1xi32> to vector<8x128xi32>
    %519 = arith.cmpi slt, %3, %518 : vector<8x128xi32>
    %cst_71 = arith.constant 0.000000e+00 : f32
    %520 = vector.broadcast %cst_71 : f32 to vector<8x128xf32>
    %521 = arith.select %519, %497, %520 : vector<8x128xi1>, vector<8x128xf32>
    %c0_72 = arith.constant 0 : index
    %c0_73 = arith.constant 0 : index
    %c0_74 = arith.constant 0 : index
    %522 = vector.load %arg4[%c0_72, %c0_73, %c0_74] : memref<9x8x128xf32, #tpu.memory_space<vmem>>, vector<1x8x128xf32>
    %523 = vector.shape_cast %522 : vector<1x8x128xf32> to vector<8x128xf32>
    %524 = vector.shape_cast %521 : vector<8x128xf32> to vector<1x8x128xf32>
    tpu.vector_store %arg4[%c0_72, %c0_73, %c0_74], %524 {strides = array<i32>} : memref<9x8x128xf32, #tpu.memory_space<vmem>>, vector<1x8x128xf32>,
    %cst_75 = arith.constant 0.000000e+00 : f32
    %525 = vector.broadcast %cst_75 : f32 to vector<8x128xf32>
    %526 = arith.select %519, %501, %525 : vector<8x128xi1>, vector<8x128xf32>
    %c1 = arith.constant 1 : index
    %c0_76 = arith.constant 0 : index
    %c0_77 = arith.constant 0 : index
    %527 = vector.load %arg4[%c1, %c0_76, %c0_77] : memref<9x8x128xf32, #tpu.memory_space<vmem>>, vector<1x8x128xf32>
    %528 = vector.shape_cast %527 : vector<1x8x128xf32> to vector<8x128xf32>
    %529 = vector.shape_cast %526 : vector<8x128xf32> to vector<1x8x128xf32>
    tpu.vector_store %arg4[%c1, %c0_76, %c0_77], %529 {strides = array<i32>} : memref<9x8x128xf32, #tpu.memory_space<vmem>>, vector<1x8x128xf32>,
    %cst_78 = arith.constant 0.000000e+00 : f32
    %530 = vector.broadcast %cst_78 : f32 to vector<8x128xf32>
    %531 = arith.select %519, %505, %530 : vector<8x128xi1>, vector<8x128xf32>
    %c2 = arith.constant 2 : index
    %c0_79 = arith.constant 0 : index
    %c0_80 = arith.constant 0 : index
    %532 = vector.load %arg4[%c2, %c0_79, %c0_80] : memref<9x8x128xf32, #tpu.memory_space<vmem>>, vector<1x8x128xf32>
    %533 = vector.shape_cast %532 : vector<1x8x128xf32> to vector<8x128xf32>
    %534 = vector.shape_cast %531 : vector<8x128xf32> to vector<1x8x128xf32>
    tpu.vector_store %arg4[%c2, %c0_79, %c0_80], %534 {strides = array<i32>} : memref<9x8x128xf32, #tpu.memory_space<vmem>>, vector<1x8x128xf32>,
    %cst_81 = arith.constant 0.000000e+00 : f32
    %535 = vector.broadcast %cst_81 : f32 to vector<8x128xf32>
    %536 = arith.select %519, %509, %535 : vector<8x128xi1>, vector<8x128xf32>
    %c3 = arith.constant 3 : index
    %c0_82 = arith.constant 0 : index
    %c0_83 = arith.constant 0 : index
    %537 = vector.load %arg4[%c3, %c0_82, %c0_83] : memref<9x8x128xf32, #tpu.memory_space<vmem>>, vector<1x8x128xf32>
    %538 = vector.shape_cast %537 : vector<1x8x128xf32> to vector<8x128xf32>
    %539 = vector.shape_cast %536 : vector<8x128xf32> to vector<1x8x128xf32>
    tpu.vector_store %arg4[%c3, %c0_82, %c0_83], %539 {strides = array<i32>} : memref<9x8x128xf32, #tpu.memory_space<vmem>>, vector<1x8x128xf32>,
    %cst_84 = arith.constant 0.000000e+00 : f32
    %540 = vector.broadcast %cst_84 : f32 to vector<8x128xf32>
    %541 = arith.select %519, %513, %540 : vector<8x128xi1>, vector<8x128xf32>
    %c4 = arith.constant 4 : index
    %c0_85 = arith.constant 0 : index
    %c0_86 = arith.constant 0 : index
    %542 = vector.load %arg4[%c4, %c0_85, %c0_86] : memref<9x8x128xf32, #tpu.memory_space<vmem>>, vector<1x8x128xf32>
    %543 = vector.shape_cast %542 : vector<1x8x128xf32> to vector<8x128xf32>
    %544 = vector.shape_cast %541 : vector<8x128xf32> to vector<1x8x128xf32>
    tpu.vector_store %arg4[%c4, %c0_85, %c0_86], %544 {strides = array<i32>} : memref<9x8x128xf32, #tpu.memory_space<vmem>>, vector<1x8x128xf32>,
    %cst_87 = arith.constant 0.000000e+00 : f32
    %545 = vector.broadcast %cst_87 : f32 to vector<8x128xf32>
    %546 = arith.select %519, %517, %545 : vector<8x128xi1>, vector<8x128xf32>
    %c5 = arith.constant 5 : index
    %c0_88 = arith.constant 0 : index
    %c0_89 = arith.constant 0 : index
    %547 = vector.load %arg4[%c5, %c0_88, %c0_89] : memref<9x8x128xf32, #tpu.memory_space<vmem>>, vector<1x8x128xf32>
    %548 = vector.shape_cast %547 : vector<1x8x128xf32> to vector<8x128xf32>
    %549 = vector.shape_cast %546 : vector<8x128xf32> to vector<1x8x128xf32>
    tpu.vector_store %arg4[%c5, %c0_88, %c0_89], %549 {strides = array<i32>} : memref<9x8x128xf32, #tpu.memory_space<vmem>>, vector<1x8x128xf32>,
    %cst_90 = arith.constant 0.000000e+00 : f32
    %550 = vector.broadcast %cst_90 : f32 to vector<8x128xf32>
    %551 = arith.select %519, %428, %550 : vector<8x128xi1>, vector<8x128xf32>
    %c6 = arith.constant 6 : index
    %c0_91 = arith.constant 0 : index
    %c0_92 = arith.constant 0 : index
    %552 = vector.load %arg4[%c6, %c0_91, %c0_92] : memref<9x8x128xf32, #tpu.memory_space<vmem>>, vector<1x8x128xf32>
    %553 = vector.shape_cast %552 : vector<1x8x128xf32> to vector<8x128xf32>
    %554 = vector.shape_cast %551 : vector<8x128xf32> to vector<1x8x128xf32>
    tpu.vector_store %arg4[%c6, %c0_91, %c0_92], %554 {strides = array<i32>} : memref<9x8x128xf32, #tpu.memory_space<vmem>>, vector<1x8x128xf32>,
    %cst_93 = arith.constant 0.000000e+00 : f32
    %555 = vector.broadcast %cst_93 : f32 to vector<8x128xf32>
    %556 = arith.select %519, %434, %555 : vector<8x128xi1>, vector<8x128xf32>
    %c7 = arith.constant 7 : index
    %c0_94 = arith.constant 0 : index
    %c0_95 = arith.constant 0 : index
    %557 = vector.load %arg4[%c7, %c0_94, %c0_95] : memref<9x8x128xf32, #tpu.memory_space<vmem>>, vector<1x8x128xf32>
    %558 = vector.shape_cast %557 : vector<1x8x128xf32> to vector<8x128xf32>
    %559 = vector.shape_cast %556 : vector<8x128xf32> to vector<1x8x128xf32>
    tpu.vector_store %arg4[%c7, %c0_94, %c0_95], %559 {strides = array<i32>} : memref<9x8x128xf32, #tpu.memory_space<vmem>>, vector<1x8x128xf32>,
    %cst_96 = arith.constant 0.000000e+00 : f32
    %560 = vector.broadcast %cst_96 : f32 to vector<8x128xf32>
    %561 = arith.select %519, %440, %560 : vector<8x128xi1>, vector<8x128xf32>
    %c8 = arith.constant 8 : index
    %c0_97 = arith.constant 0 : index
    %c0_98 = arith.constant 0 : index
    %562 = vector.load %arg4[%c8, %c0_97, %c0_98] : memref<9x8x128xf32, #tpu.memory_space<vmem>>, vector<1x8x128xf32>
    %563 = vector.shape_cast %562 : vector<1x8x128xf32> to vector<8x128xf32>
    %564 = vector.shape_cast %561 : vector<8x128xf32> to vector<1x8x128xf32>
    tpu.vector_store %arg4[%c8, %c0_97, %c0_98], %564 {strides = array<i32>} : memref<9x8x128xf32, #tpu.memory_space<vmem>>, vector<1x8x128xf32>,
    return
  }
  func.func @transform_0(%arg0: i32) -> (i32, i32) {
    %c0_i32 = arith.constant 0 : i32
    %c0_i32_0 = arith.constant 0 : i32
    return %arg0, %c0_i32 : i32, i32
  }
  func.func @transform_1(%arg0: i32) -> (i32, i32) {
    %c0_i32 = arith.constant 0 : i32
    %c0_i32_0 = arith.constant 0 : i32
    return %arg0, %c0_i32 : i32, i32
  }
  func.func @transform_2(%arg0: i32) -> (i32, i32) {
    %c0_i32 = arith.constant 0 : i32
    %c0_i32_0 = arith.constant 0 : i32
    return %arg0, %c0_i32 : i32, i32
  }
  func.func @transform_3(%arg0: i32) -> (i32, i32, i32) {
    %c0_i32 = arith.constant 0 : i32
    %c0_i32_0 = arith.constant 0 : i32
    %c0_i32_1 = arith.constant 0 : i32
    return %c0_i32, %arg0, %c0_i32_0 : i32, i32, i32
  }
}

</mosaic_0001>

<llo_original>
// kernel: tpu_custom_call.1
$region0: #{tpu_custom_call.1}
  #allocation0 [shape = 'u32[]', space=smem, size = 0x4, offset = 0x4, fixed_abs, tag = 'smem constant byte address 0x4 - core index']
  #allocation1 [shape = 'u32[144,128]{1,0:T(1,128)}', space=vmem, size = 0x12000, scoped, tag = 'internal scratch']
  %s0 = inlined_call_operand.vmem [shape: s32[8,1], index: 0, kind: input, shape index: {}]
  %s1 = inlined_call_operand.vmem [shape: f32[8,128], index: 1, kind: input, shape index: {}]
  %s2 = inlined_call_operand.vmem [shape: f32[8,128], index: 2, kind: input, shape index: {}]
  %s3 = inlined_call_operand.hbm [shape: f32[9,8,128], index: 3, kind: output, shape index: {}]
  %s4 = sld [smem:[#allocation0]]
  $region22: #{tpu_custom_call.1} parent=0
    _
  %s6 = ssub.s32 1, %s4
  %s7 = scalar_select 0, %s6, %s4
  $region1: #{tpu_custom_call.1} parent=0
    #allocation2 [shape = 'u8[36864]{0}', space=vmem, size = 0x9000, scoped, tag = 'output window, operand 0, single buffered']
    #allocation3 [shape = 's32[1]{0}', space=sflag, size = 0x4, scoped, tag = 'scoped memory for tpu_custom_call.1']
    %8 = vsyncpa [#allocation3], 0
    // Predicated region
    $region2: #{tpu_custom_call.1} parent=1 // pred_check
      _
    $region3: #{tpu_custom_call.1} parent=1 // pred_check_branch
      %10 = sbr.rel (0) target = $region5
    $region4: #{tpu_custom_call.1} parent=1 // pred_region
      _
    $region5: #{tpu_custom_call.1} parent=1 // pred_fallthru
      _
    // Predicated region
    $region6: #{tpu_custom_call.1} parent=1 // pred_check
      _
    $region7: #{tpu_custom_call.1} parent=1 // pred_check_branch
      %12 = sbr.rel (0) target = $region9
    $region8: #{tpu_custom_call.1} parent=1 // pred_region
      _
    $region9: #{tpu_custom_call.1} parent=1 // pred_fallthru
      _
    // Predicated region
    $region10: #{tpu_custom_call.1} parent=1 // pred_check
      _
    $region11: #{tpu_custom_call.1} parent=1 // pred_check_branch
      %14 = sbr.rel (0) target = $region13
    $region12: #{tpu_custom_call.1} parent=1 // pred_region
      _
    $region13: #{tpu_custom_call.1} parent=1 // pred_fallthru
      _
    %v15 = vld [vmem:[%s1] sm:$0xff]
    %v16 = vld [vmem:[%s2] sm:$0xff]
    %v17 = vld [vmem:[%s0] sm:$0xff]
    %v18 = vlaneseq
    %v19 = vand.u32 %v18, 127
    %vm20 = vcmp.eq.s32.totalorder %v19, 0
    %v21 = vsel %vm20, 0.0, 1.33
    %v22 = vand.u32 2147483647, %v15
    %vm23 = vcmp.le.f32.partialorder %v22, 0.7853982
    %vm24 = vcmp.lt.s32.totalorder %v15, 0
    %v25 = vand.u32 %v15, 2139095040
    %v26 = vshrl.u32 %v25, 23
    %v27 = vsub.s32 %v26, 127
    %v28 = vand.u32 2147483647, %v15
    %v29 = vand.u32 %v28, 8388607
    %v30 = vor.u32 %v29, 8388608
    %v31 = vsub.s32 0, %v30
    %v32 = vadd.s32 %v27, 1
    %vm33 = vcmp.gt.s32.totalorder %v32, 0
    %v34 = vsel %vm33, %v32, 0
    %v35 = vshrl.u32 %v34, 5
    %v36 = vand.u32 %v34, 31
    %v37 = vsub.s32 32, %v36
    %v38 = vshrl.u32 683565275, %v37
    %v39 = vshll.u32 683565275, %v36
    %v40 = vshrl.u32 2475754826, %v37
    %v41 = vor.u32 %v39, %v40
    %v42 = vshll.u32 2475754826, %v36
    %v43 = vshrl.u32 2131351028, %v37
    %v44 = vor.u32 %v42, %v43
    %v45 = vshll.u32 2131351028, %v36
    %v46 = vshrl.u32 2102212464, %v37
    %v47 = vor.u32 %v45, %v46
    %v48 = vshll.u32 2102212464, %v36
    %v49 = vshrl.u32 920167782, %v37
    %v50 = vor.u32 %v48, %v49
    %v51 = vshll.u32 920167782, %v36
    %v52 = vshrl.u32 1326507024, %v37
    %v53 = vor.u32 %v51, %v52
    %vm54 = vcmp.lt.s32.totalorder %v35, 1
    %vm55 = vcmp.lt.s32.totalorder %v35, 2
    %vm56 = vcmp.lt.s32.totalorder %v35, 3
    %vm57 = vcmp.lt.s32.totalorder %v35, 4
    %v58 = vsel %vm54, %v38, %v41
    %v59 = vsel %vm57, %v47, 2102212464
    %v60 = vsel %vm56, %v44, %v59
    %v61 = vsel %vm55, %v58, %v60
    %v62 = vsel %vm54, %v41, %v44
    %v63 = vsel %vm57, %v50, 920167782
    %v64 = vsel %vm56, %v47, %v63
    %v65 = vsel %vm55, %v62, %v64
    %v66 = vsel %vm54, %v44, %v47
    %v67 = vsel %vm57, %v53, 1326507024
    %v68 = vsel %vm56, %v50, %v67
    %v69 = vsel %vm55, %v66, %v68
    %v70 = vshll.u32 %v30, 8
    %v71 = vmul.u32.u64.compose %v70, %v69
    %v72 = vextract.low.u32 %v71
    %v73 = vextract.high.u32 %v71
    %v74 = vmul.u32.u64.compose %v70, %v65
    %v75 = vextract.low.u32 %v74
    %v76 = vextract.high.u32 %v74
    %v77 = vmul.u32 %v70, %v61
    %v78 = vadd.s32 %v73, %v75
    %vm79 = vc.u32 %v73, %v75
    %v80 = vadd.s32 %v76, 1
    %v81 = vsel %vm79, %v80, %v76
    %v82 = vadd.s32 %v77, %v81
    %v83 = vadd.s32 %v82, 536870912
    %v84 = vshrl.u32 %v83, 30
    %v85 = vshll.u32 %v84, 30
    %v86 = vsub.s32 %v82, %v85
    %vm87 = vcmp.lt.s32.totalorder %v86, 0
    %v88 = vsub.s32 0, %v86
    %v89 = vsel %vm87, %v88, %v86
    %v90 = vclz %v89
    %v91 = vsub.s32 %v90, 2
    %vm92 = vcmp.gt.s32.totalorder 0, %v91
    %v93 = vsel %vm92, 0, %v91
    %v94 = vsub.s32 32, %v93
    %v95 = vshll.u32 %v86, %v93
    %v96 = vshrl.u32 %v78, %v94
    %v97 = vor.u32 %v95, %v96
    %v98 = vsub.s32 4294967266, %v93
    %v99 = vadd.s32 %v98, 127
    %v100 = vshll.u32 %v99, 23
    %v101 = vor.u32 4788187, %v100
    %v102 = vand.u32 2147483647, %v101
    %v104 = vcvt.s32.f32 %v97
    %v105 = vmul.f32 %v104, %v102
    %v106 = vxor.u32 %v105, 2147483648
    %v107 = vsel %vm24, %v106, %v105
    %v108 = vsub.s32 4, %v84
    %v109 = vsel %vm24, %v108, %v84
    %v110 = vsel %vm23, %v15, %v107
    %v111 = vsel %vm23, 0, %v109
    %v112 = vcosq.f32.pop %v110
    %v113 = vsinq.f32.pop %v110
    %vm114 = vweird.f32 %v15
    %v115 = vand.u32 %v111, 3
    %vm116 = vcmp.lt.s32.totalorder %v115, 2
    %vm117 = vcmp.eq.s32.totalorder %v115, 0
    %v118 = vxor.u32 %v113, 2147483648
    %v119 = vsel %vm117, %v112, %v118
    %vm120 = vcmp.eq.s32.totalorder %v115, 2
    %v121 = vxor.u32 %v112, 2147483648
    %v122 = vsel %vm120, %v121, %v113
    %v123 = vsel %vm116, %v119, %v122
    %v124 = vsel %vm114, nan, %v123
    %v125 = vand.u32 2147483647, %v15
    %vm126 = vcmp.le.f32.partialorder %v125, 0.7853982
    %vm127 = vcmp.lt.s32.totalorder %v15, 0
    %v128 = vand.u32 %v15, 2139095040
    %v129 = vshrl.u32 %v128, 23
    %v130 = vsub.s32 %v129, 127
    %v131 = vand.u32 2147483647, %v15
    %v132 = vand.u32 %v131, 8388607
    %v133 = vor.u32 %v132, 8388608
    %v134 = vsub.s32 0, %v133
    %v135 = vadd.s32 %v130, 1
    %vm136 = vcmp.gt.s32.totalorder %v135, 0
    %v137 = vsel %vm136, %v135, 0
    %v138 = vshrl.u32 %v137, 5
    %v139 = vand.u32 %v137, 31
    %v140 = vsub.s32 32, %v139
    %v141 = vshrl.u32 683565275, %v140
    %v142 = vshll.u32 683565275, %v139
    %v143 = vshrl.u32 2475754826, %v140
    %v144 = vor.u32 %v142, %v143
    %v145 = vshll.u32 2475754826, %v139
    %v146 = vshrl.u32 2131351028, %v140
    %v147 = vor.u32 %v145, %v146
    %v148 = vshll.u32 2131351028, %v139
    %v149 = vshrl.u32 2102212464, %v140
    %v150 = vor.u32 %v148, %v149
    %v151 = vshll.u32 2102212464, %v139
    %v152 = vshrl.u32 920167782, %v140
    %v153 = vor.u32 %v151, %v152
    %v154 = vshll.u32 920167782, %v139
    %v155 = vshrl.u32 1326507024, %v140
    %v156 = vor.u32 %v154, %v155
    %vm157 = vcmp.lt.s32.totalorder %v138, 1
    %vm158 = vcmp.lt.s32.totalorder %v138, 2
    %vm159 = vcmp.lt.s32.totalorder %v138, 3
    %vm160 = vcmp.lt.s32.totalorder %v138, 4
    %v161 = vsel %vm157, %v141, %v144
    %v162 = vsel %vm160, %v150, 2102212464
    %v163 = vsel %vm159, %v147, %v162
    %v164 = vsel %vm158, %v161, %v163
    %v165 = vsel %vm157, %v144, %v147
    %v166 = vsel %vm160, %v153, 920167782
    %v167 = vsel %vm159, %v150, %v166
    %v168 = vsel %vm158, %v165, %v167
    %v169 = vsel %vm157, %v147, %v150
    %v170 = vsel %vm160, %v156, 1326507024
    %v171 = vsel %vm159, %v153, %v170
    %v172 = vsel %vm158, %v169, %v171
    %v173 = vshll.u32 %v133, 8
    %v174 = vmul.u32.u64.compose %v173, %v172
    %v175 = vextract.low.u32 %v174
    %v176 = vextract.high.u32 %v174
    %v177 = vmul.u32.u64.compose %v173, %v168
    %v178 = vextract.low.u32 %v177
    %v179 = vextract.high.u32 %v177
    %v180 = vmul.u32 %v173, %v164
    %v181 = vadd.s32 %v176, %v178
    %vm182 = vc.u32 %v176, %v178
    %v183 = vadd.s32 %v179, 1
    %v184 = vsel %vm182, %v183, %v179
    %v185 = vadd.s32 %v180, %v184
    %v186 = vadd.s32 %v185, 536870912
    %v187 = vshrl.u32 %v186, 30
    %v188 = vshll.u32 %v187, 30
    %v189 = vsub.s32 %v185, %v188
    %vm190 = vcmp.lt.s32.totalorder %v189, 0
    %v191 = vsub.s32 0, %v189
    %v192 = vsel %vm190, %v191, %v189
    %v193 = vclz %v192
    %v194 = vsub.s32 %v193, 2
    %vm195 = vcmp.gt.s32.totalorder 0, %v194
    %v196 = vsel %vm195, 0, %v194
    %v197 = vsub.s32 32, %v196
    %v198 = vshll.u32 %v189, %v196
    %v199 = vshrl.u32 %v181, %v197
    %v200 = vor.u32 %v198, %v199
    %v201 = vsub.s32 4294967266, %v196
    %v202 = vadd.s32 %v201, 127
    %v203 = vshll.u32 %v202, 23
    %v204 = vor.u32 4788187, %v203
    %v205 = vand.u32 2147483647, %v204
    %v207 = vcvt.s32.f32 %v200
    %v208 = vmul.f32 %v207, %v205
    %v209 = vxor.u32 %v208, 2147483648
    %v210 = vsel %vm127, %v209, %v208
    %v211 = vsub.s32 4, %v187
    %v212 = vsel %vm127, %v211, %v187
    %v213 = vsel %vm126, %v15, %v210
    %v214 = vsel %vm126, 0, %v212
    %v215 = vcosq.f32.pop %v213
    %v216 = vsinq.f32.pop %v213
    %vm217 = vweird.f32 %v15
    %v218 = vadd.s32 %v214, 3
    %v219 = vand.u32 %v218, 3
    %vm220 = vcmp.lt.s32.totalorder %v219, 2
    %vm221 = vcmp.eq.s32.totalorder %v219, 0
    %v222 = vxor.u32 %v216, 2147483648
    %v223 = vsel %vm221, %v215, %v222
    %vm224 = vcmp.eq.s32.totalorder %v219, 2
    %v225 = vxor.u32 %v215, 2147483648
    %v226 = vsel %vm224, %v225, %v216
    %v227 = vsel %vm220, %v223, %v226
    %v228 = vsel %vm217, nan, %v227
    %v229 = vmul.f32 %v228, 0.36003587
    %v230 = vsub.f32 0.0, %v229
    %v231 = vmul.f32 %v228, 0.93293846
    %v232 = vmul.f32 %v124, 0.36003587
    %v233 = vmul.f32 %v124, 0.93293846
    %v234 = vsub.f32 0.0, %v233
    %v235 = vmul.f32 %v21, %v124
    %v236 = vmul.f32 %v21, %v228
    %v237 = vand.u32 2147483647, %v16
    %vm238 = vcmp.le.f32.partialorder %v237, 0.7853982
    %vm239 = vcmp.lt.s32.totalorder %v16, 0
    %v240 = vand.u32 %v16, 2139095040
    %v241 = vshrl.u32 %v240, 23
    %v242 = vsub.s32 %v241, 127
    %v243 = vand.u32 2147483647, %v16
    %v244 = vand.u32 %v243, 8388607
    %v245 = vor.u32 %v244, 8388608
    %v246 = vsub.s32 0, %v245
    %v247 = vadd.s32 %v242, 1
    %vm248 = vcmp.gt.s32.totalorder %v247, 0
    %v249 = vsel %vm248, %v247, 0
    %v250 = vshrl.u32 %v249, 5
    %v251 = vand.u32 %v249, 31
    %v252 = vsub.s32 32, %v251
    %v253 = vshrl.u32 683565275, %v252
    %v254 = vshll.u32 683565275, %v251
    %v255 = vshrl.u32 2475754826, %v252
    %v256 = vor.u32 %v254, %v255
    %v257 = vshll.u32 2475754826, %v251
    %v258 = vshrl.u32 2131351028, %v252
    %v259 = vor.u32 %v257, %v258
    %v260 = vshll.u32 2131351028, %v251
    %v261 = vshrl.u32 2102212464, %v252
    %v262 = vor.u32 %v260, %v261
    %v263 = vshll.u32 2102212464, %v251
    %v264 = vshrl.u32 920167782, %v252
    %v265 = vor.u32 %v263, %v264
    %v266 = vshll.u32 920167782, %v251
    %v267 = vshrl.u32 1326507024, %v252
    %v268 = vor.u32 %v266, %v267
    %vm269 = vcmp.lt.s32.totalorder %v250, 1
    %vm270 = vcmp.lt.s32.totalorder %v250, 2
    %vm271 = vcmp.lt.s32.totalorder %v250, 3
    %vm272 = vcmp.lt.s32.totalorder %v250, 4
    %v273 = vsel %vm269, %v253, %v256
    %v274 = vsel %vm272, %v262, 2102212464
    %v275 = vsel %vm271, %v259, %v274
    %v276 = vsel %vm270, %v273, %v275
    %v277 = vsel %vm269, %v256, %v259
    %v278 = vsel %vm272, %v265, 920167782
    %v279 = vsel %vm271, %v262, %v278
    %v280 = vsel %vm270, %v277, %v279
    %v281 = vsel %vm269, %v259, %v262
    %v282 = vsel %vm272, %v268, 1326507024
    %v283 = vsel %vm271, %v265, %v282
    %v284 = vsel %vm270, %v281, %v283
    %v285 = vshll.u32 %v245, 8
    %v286 = vmul.u32.u64.compose %v285, %v284
    %v287 = vextract.low.u32 %v286
    %v288 = vextract.high.u32 %v286
    %v289 = vmul.u32.u64.compose %v285, %v280
    %v290 = vextract.low.u32 %v289
    %v291 = vextract.high.u32 %v289
    %v292 = vmul.u32 %v285, %v276
    %v293 = vadd.s32 %v288, %v290
    %vm294 = vc.u32 %v288, %v290
    %v295 = vadd.s32 %v291, 1
    %v296 = vsel %vm294, %v295, %v291
    %v297 = vadd.s32 %v292, %v296
    %v298 = vadd.s32 %v297, 536870912
    %v299 = vshrl.u32 %v298, 30
    %v300 = vshll.u32 %v299, 30
    %v301 = vsub.s32 %v297, %v300
    %vm302 = vcmp.lt.s32.totalorder %v301, 0
    %v303 = vsub.s32 0, %v301
    %v304 = vsel %vm302, %v303, %v301
    %v305 = vclz %v304
    %v306 = vsub.s32 %v305, 2
    %vm307 = vcmp.gt.s32.totalorder 0, %v306
    %v308 = vsel %vm307, 0, %v306
    %v309 = vsub.s32 32, %v308
    %v310 = vshll.u32 %v301, %v308
    %v311 = vshrl.u32 %v293, %v309
    %v312 = vor.u32 %v310, %v311
    %v313 = vsub.s32 4294967266, %v308
    %v314 = vadd.s32 %v313, 127
    %v315 = vshll.u32 %v314, 23
    %v316 = vor.u32 4788187, %v315
    %v317 = vand.u32 2147483647, %v316
    %v319 = vcvt.s32.f32 %v312
    %v320 = vmul.f32 %v319, %v317
    %v321 = vxor.u32 %v320, 2147483648
    %v322 = vsel %vm239, %v321, %v320
    %v323 = vsub.s32 4, %v299
    %v324 = vsel %vm239, %v323, %v299
    %v325 = vsel %vm238, %v16, %v322
    %v326 = vsel %vm238, 0, %v324
    %v327 = vcosq.f32.pop %v325
    %v328 = vsinq.f32.pop %v325
    %vm329 = vweird.f32 %v16
    %v330 = vand.u32 %v326, 3
    %vm331 = vcmp.lt.s32.totalorder %v330, 2
    %vm332 = vcmp.eq.s32.totalorder %v330, 0
    %v333 = vxor.u32 %v328, 2147483648
    %v334 = vsel %vm332, %v327, %v333
    %vm335 = vcmp.eq.s32.totalorder %v330, 2
    %v336 = vxor.u32 %v327, 2147483648
    %v337 = vsel %vm335, %v336, %v328
    %v338 = vsel %vm331, %v334, %v337
    %v339 = vsel %vm329, nan, %v338
    %v340 = vand.u32 2147483647, %v16
    %vm341 = vcmp.le.f32.partialorder %v340, 0.7853982
    %vm342 = vcmp.lt.s32.totalorder %v16, 0
    %v343 = vand.u32 %v16, 2139095040
    %v344 = vshrl.u32 %v343, 23
    %v345 = vsub.s32 %v344, 127
    %v346 = vand.u32 2147483647, %v16
    %v347 = vand.u32 %v346, 8388607
    %v348 = vor.u32 %v347, 8388608
    %v349 = vsub.s32 0, %v348
    %v350 = vadd.s32 %v345, 1
    %vm351 = vcmp.gt.s32.totalorder %v350, 0
    %v352 = vsel %vm351, %v350, 0
    %v353 = vshrl.u32 %v352, 5
    %v354 = vand.u32 %v352, 31
    %v355 = vsub.s32 32, %v354
    %v356 = vshrl.u32 683565275, %v355
    %v357 = vshll.u32 683565275, %v354
    %v358 = vshrl.u32 2475754826, %v355
    %v359 = vor.u32 %v357, %v358
    %v360 = vshll.u32 2475754826, %v354
    %v361 = vshrl.u32 2131351028, %v355
    %v362 = vor.u32 %v360, %v361
    %v363 = vshll.u32 2131351028, %v354
    %v364 = vshrl.u32 2102212464, %v355
    %v365 = vor.u32 %v363, %v364
    %v366 = vshll.u32 2102212464, %v354
    %v367 = vshrl.u32 920167782, %v355
    %v368 = vor.u32 %v366, %v367
    %v369 = vshll.u32 920167782, %v354
    %v370 = vshrl.u32 1326507024, %v355
    %v371 = vor.u32 %v369, %v370
    %vm372 = vcmp.lt.s32.totalorder %v353, 1
    %vm373 = vcmp.lt.s32.totalorder %v353, 2
    %vm374 = vcmp.lt.s32.totalorder %v353, 3
    %vm375 = vcmp.lt.s32.totalorder %v353, 4
    %v376 = vsel %vm372, %v356, %v359
    %v377 = vsel %vm375, %v365, 2102212464
    %v378 = vsel %vm374, %v362, %v377
    %v379 = vsel %vm373, %v376, %v378
    %v380 = vsel %vm372, %v359, %v362
    %v381 = vsel %vm375, %v368, 920167782
    %v382 = vsel %vm374, %v365, %v381
    %v383 = vsel %vm373, %v380, %v382
    %v384 = vsel %vm372, %v362, %v365
    %v385 = vsel %vm375, %v371, 1326507024
    %v386 = vsel %vm374, %v368, %v385
    %v387 = vsel %vm373, %v384, %v386
    %v388 = vshll.u32 %v348, 8
    %v389 = vmul.u32.u64.compose %v388, %v387
    %v390 = vextract.low.u32 %v389
    %v391 = vextract.high.u32 %v389
    %v392 = vmul.u32.u64.compose %v388, %v383
    %v393 = vextract.low.u32 %v392
    %v394 = vextract.high.u32 %v392
    %v395 = vmul.u32 %v388, %v379
    %v396 = vadd.s32 %v391, %v393
    %vm397 = vc.u32 %v391, %v393
    %v398 = vadd.s32 %v394, 1
    %v399 = vsel %vm397, %v398, %v394
    %v400 = vadd.s32 %v395, %v399
    %v401 = vadd.s32 %v400, 536870912
    %v402 = vshrl.u32 %v401, 30
    %v403 = vshll.u32 %v402, 30
    %v404 = vsub.s32 %v400, %v403
    %vm405 = vcmp.lt.s32.totalorder %v404, 0
    %v406 = vsub.s32 0, %v404
    %v407 = vsel %vm405, %v406, %v404
    %v408 = vclz %v407
    %v409 = vsub.s32 %v408, 2
    %vm410 = vcmp.gt.s32.totalorder 0, %v409
    %v411 = vsel %vm410, 0, %v409
    %v412 = vsub.s32 32, %v411
    %v413 = vshll.u32 %v404, %v411
    %v414 = vshrl.u32 %v396, %v412
    %v415 = vor.u32 %v413, %v414
    %v416 = vsub.s32 4294967266, %v411
    %v417 = vadd.s32 %v416, 127
    %v418 = vshll.u32 %v417, 23
    %v419 = vor.u32 4788187, %v418
    %v420 = vand.u32 2147483647, %v419
    %v422 = vcvt.s32.f32 %v415
    %v423 = vmul.f32 %v422, %v420
    %v424 = vxor.u32 %v423, 2147483648
    %v425 = vsel %vm342, %v424, %v423
    %v426 = vsub.s32 4, %v402
    %v427 = vsel %vm342, %v426, %v402
    %v428 = vsel %vm341, %v16, %v425
    %v429 = vsel %vm341, 0, %v427
    %v430 = vcosq.f32.pop %v428
    %v431 = vsinq.f32.pop %v428
    %vm432 = vweird.f32 %v16
    %v433 = vadd.s32 %v429, 3
    %v434 = vand.u32 %v433, 3
    %vm435 = vcmp.lt.s32.totalorder %v434, 2
    %vm436 = vcmp.eq.s32.totalorder %v434, 0
    %v437 = vxor.u32 %v431, 2147483648
    %v438 = vsel %vm436, %v430, %v437
    %vm439 = vcmp.eq.s32.totalorder %v434, 2
    %v440 = vxor.u32 %v430, 2147483648
    %v441 = vsel %vm439, %v440, %v431
    %v442 = vsel %vm435, %v438, %v441
    %v443 = vsel %vm432, nan, %v442
    %v444 = vmul.f32 %v443, 0.47080794
    %v445 = vsub.f32 0.0, %v444
    %v446 = vmul.f32 %v443, 0.88223577
    %v447 = vmul.f32 %v339, 0.47080794
    %v448 = vmul.f32 %v339, 0.88223577
    %v449 = vsub.f32 0.0, %v448
    %v450 = vmul.f32 %v339, 1.46
    %v451 = vmul.f32 %v443, 1.46
    %v452 = vmul.f32 %v124, %v339
    %v453 = vmul.f32 %v230, %v443
    %v454 = vadd.f32 %v452, %v453
    %v455 = vmul.f32 %v124, %v445
    %v456 = vmul.f32 %v230, %v447
    %v457 = vadd.f32 %v455, %v456
    %v458 = vmul.f32 %v231, 0.88223577
    %v459 = vadd.f32 %v457, %v458
    %v460 = vmul.f32 %v124, %v446
    %v461 = vmul.f32 %v230, %v449
    %v462 = vadd.f32 %v460, %v461
    %v463 = vmul.f32 %v231, 0.47080794
    %v464 = vadd.f32 %v462, %v463
    %v465 = vmul.f32 %v228, %v339
    %v466 = vmul.f32 %v232, %v443
    %v467 = vadd.f32 %v465, %v466
    %v468 = vmul.f32 %v228, %v445
    %v469 = vmul.f32 %v232, %v447
    %v470 = vadd.f32 %v468, %v469
    %v471 = vmul.f32 %v234, 0.88223577
    %v472 = vadd.f32 %v470, %v471
    %v473 = vmul.f32 %v228, %v446
    %v474 = vmul.f32 %v232, %v449
    %v475 = vadd.f32 %v473, %v474
    %v476 = vmul.f32 %v234, 0.47080794
    %v477 = vadd.f32 %v475, %v476
    %v478 = vmul.f32 %v443, 0.93293846
    %v479 = vmul.f32 %v447, 0.93293846
    %v480 = vadd.f32 %v479, 0.3176365
    %v481 = vmul.f32 %v449, 0.93293846
    %v482 = vadd.f32 %v481, 0.16950774
    %v483 = vmul.f32 %v124, %v450
    %v484 = vmul.f32 %v230, %v451
    %v485 = vadd.f32 %v483, %v484
    %v486 = vadd.f32 %v485, %v235
    %v487 = vmul.f32 %v228, %v450
    %v488 = vmul.f32 %v232, %v451
    %v489 = vadd.f32 %v487, %v488
    %v490 = vadd.f32 %v489, %v236
    %v491 = vmul.f32 %v451, 0.93293846
    %v492 = vmul.f32 %v454, -0.9999521
    %v493 = vmul.f32 %v459, -0.009792497
    %v494 = vadd.f32 %v492, %v493
    %v495 = vmul.f32 %v454, 0.0051000873
    %v496 = vmul.f32 %v459, -0.5207908
    %v497 = vadd.f32 %v495, %v496
    %v498 = vmul.f32 %v464, 0.85366905
    %v499 = vadd.f32 %v497, %v498
    %v500 = vmul.f32 %v454, -0.008359552
    %v501 = vmul.f32 %v459, 0.85362816
    %v502 = vadd.f32 %v500, %v501
    %v503 = vmul.f32 %v464, 0.5208158
    %v504 = vadd.f32 %v502, %v503
    %v505 = vmul.f32 %v467, -0.9999521
    %v506 = vmul.f32 %v472, -0.009792497
    %v507 = vadd.f32 %v505, %v506
    %v508 = vmul.f32 %v467, 0.0051000873
    %v509 = vmul.f32 %v472, -0.5207908
    %v510 = vadd.f32 %v508, %v509
    %v511 = vmul.f32 %v477, 0.85366905
    %v512 = vadd.f32 %v510, %v511
    %v513 = vmul.f32 %v467, -0.008359552
    %v514 = vmul.f32 %v472, 0.85362816
    %v515 = vadd.f32 %v513, %v514
    %v516 = vmul.f32 %v477, 0.5208158
    %v517 = vadd.f32 %v515, %v516
    %v518 = vmul.f32 %v478, -0.9999521
    %v519 = vmul.f32 %v480, -0.009792497
    %v520 = vadd.f32 %v518, %v519
    %v521 = vmul.f32 %v478, 0.0051000873
    %v522 = vmul.f32 %v480, -0.5207908
    %v523 = vadd.f32 %v521, %v522
    %v524 = vmul.f32 %v482, 0.85366905
    %v525 = vadd.f32 %v523, %v524
    %v526 = vmul.f32 %v478, -0.008359552
    %v527 = vmul.f32 %v480, 0.85362816
    %v528 = vadd.f32 %v526, %v527
    %v529 = vmul.f32 %v482, 0.5208158
    %v530 = vadd.f32 %v528, %v529
    %v531 = vmul.f32 %v454, -1.5249269
    %v532 = vmul.f32 %v459, -0.014933558
    %v533 = vadd.f32 %v531, %v532
    %v534 = vadd.f32 %v533, %v486
    %v535 = vmul.f32 %v467, -1.5249269
    %v536 = vmul.f32 %v472, -0.014933558
    %v537 = vadd.f32 %v535, %v536
    %v538 = vadd.f32 %v537, %v490
    %v539 = vmul.f32 %v478, -1.5249269
    %v540 = vmul.f32 %v480, -0.014933558
    %v541 = vadd.f32 %v539, %v540
    %v542 = vadd.f32 %v541, %v491
    %544 = vrot.lane.b32.xlu0 %v494, 1
    %v545 = vpop.permute.xlu0 %544
    %vm547 = vcmask 7168
    %v548 = vsel %vm547, 1.0, %v545
    %550 = vrot.lane.b32.xlu0 %v499, 1
    %v551 = vpop.permute.xlu0 %550
    %v553 = vsel %vm547, 0.0, %v551
    %555 = vrot.lane.b32.xlu0 %v504, 1
    %v556 = vpop.permute.xlu0 %555
    %v558 = vsel %vm547, 0.0, %v556
    %560 = vrot.lane.b32.xlu0 %v507, 1
    %v561 = vpop.permute.xlu0 %560
    %v563 = vsel %vm547, 0.0, %v561
    %565 = vrot.lane.b32.xlu0 %v512, 1
    %v566 = vpop.permute.xlu0 %565
    %v568 = vsel %vm547, 1.0, %v566
    %570 = vrot.lane.b32.xlu0 %v517, 1
    %v571 = vpop.permute.xlu0 %570
    %v573 = vsel %vm547, 0.0, %v571
    %575 = vrot.lane.b32.xlu0 %v520, 1
    %v576 = vpop.permute.xlu0 %575
    %v578 = vsel %vm547, 0.0, %v576
    %580 = vrot.lane.b32.xlu0 %v525, 1
    %v581 = vpop.permute.xlu0 %580
    %v583 = vsel %vm547, 0.0, %v581
    %585 = vrot.lane.b32.xlu0 %v530, 1
    %v586 = vpop.permute.xlu0 %585
    %v588 = vsel %vm547, 1.0, %v586
    %590 = vrot.lane.b32.xlu0 %v534, 1
    %v591 = vpop.permute.xlu0 %590
    %v593 = vsel %vm547, 0.0, %v591
    %595 = vrot.lane.b32.xlu0 %v538, 1
    %v596 = vpop.permute.xlu0 %595
    %v598 = vsel %vm547, 0.0, %v596
    %600 = vrot.lane.b32.xlu0 %v542, 1
    %v601 = vpop.permute.xlu0 %600
    %v603 = vsel %vm547, 0.0, %v601
    %v604 = vmul.f32 %v548, %v494
    %v605 = vmul.f32 %v553, %v507
    %v606 = vadd.f32 %v604, %v605
    %v607 = vmul.f32 %v558, %v520
    %v608 = vadd.f32 %v606, %v607
    %v609 = vmul.f32 %v548, %v499
    %v610 = vmul.f32 %v553, %v512
    %v611 = vadd.f32 %v609, %v610
    %v612 = vmul.f32 %v558, %v525
    %v613 = vadd.f32 %v611, %v612
    %v614 = vmul.f32 %v548, %v504
    %v615 = vmul.f32 %v553, %v517
    %v616 = vadd.f32 %v614, %v615
    %v617 = vmul.f32 %v558, %v530
    %v618 = vadd.f32 %v616, %v617
    %v619 = vmul.f32 %v563, %v494
    %v620 = vmul.f32 %v568, %v507
    %v621 = vadd.f32 %v619, %v620
    %v622 = vmul.f32 %v573, %v520
    %v623 = vadd.f32 %v621, %v622
    %v624 = vmul.f32 %v563, %v499
    %v625 = vmul.f32 %v568, %v512
    %v626 = vadd.f32 %v624, %v625
    %v627 = vmul.f32 %v573, %v525
    %v628 = vadd.f32 %v626, %v627
    %v629 = vmul.f32 %v563, %v504
    %v630 = vmul.f32 %v568, %v517
    %v631 = vadd.f32 %v629, %v630
    %v632 = vmul.f32 %v573, %v530
    %v633 = vadd.f32 %v631, %v632
    %v634 = vmul.f32 %v578, %v494
    %v635 = vmul.f32 %v583, %v507
    %v636 = vadd.f32 %v634, %v635
    %v637 = vmul.f32 %v588, %v520
    %v638 = vadd.f32 %v636, %v637
    %v639 = vmul.f32 %v578, %v499
    %v640 = vmul.f32 %v583, %v512
    %v641 = vadd.f32 %v639, %v640
    %v642 = vmul.f32 %v588, %v525
    %v643 = vadd.f32 %v641, %v642
    %v644 = vmul.f32 %v578, %v504
    %v645 = vmul.f32 %v583, %v517
    %v646 = vadd.f32 %v644, %v645
    %v647 = vmul.f32 %v588, %v530
    %v648 = vadd.f32 %v646, %v647
    %v649 = vmul.f32 %v548, %v534
    %v650 = vmul.f32 %v553, %v538
    %v651 = vadd.f32 %v649, %v650
    %v652 = vmul.f32 %v558, %v542
    %v653 = vadd.f32 %v651, %v652
    %v654 = vadd.f32 %v653, %v593
    %v655 = vmul.f32 %v563, %v534
    %v656 = vmul.f32 %v568, %v538
    %v657 = vadd.f32 %v655, %v656
    %v658 = vmul.f32 %v573, %v542
    %v659 = vadd.f32 %v657, %v658
    %v660 = vadd.f32 %v659, %v598
    %v661 = vmul.f32 %v578, %v534
    %v662 = vmul.f32 %v583, %v538
    %v663 = vadd.f32 %v661, %v662
    %v664 = vmul.f32 %v588, %v542
    %v665 = vadd.f32 %v663, %v664
    %v666 = vadd.f32 %v665, %v603
    %668 = vrot.lane.b32.xlu0 %v608, 2
    %v669 = vpop.permute.xlu0 %668
    %vm671 = vcmask 15360
    %v672 = vsel %vm671, 1.0, %v669
    %674 = vrot.lane.b32.xlu0 %v613, 2
    %v675 = vpop.permute.xlu0 %674
    %v677 = vsel %vm671, 0.0, %v675
    %679 = vrot.lane.b32.xlu0 %v618, 2
    %v680 = vpop.permute.xlu0 %679
    %v682 = vsel %vm671, 0.0, %v680
    %684 = vrot.lane.b32.xlu0 %v623, 2
    %v685 = vpop.permute.xlu0 %684
    %v687 = vsel %vm671, 0.0, %v685
    %689 = vrot.lane.b32.xlu0 %v628, 2
    %v690 = vpop.permute.xlu0 %689
    %v692 = vsel %vm671, 1.0, %v690
    %694 = vrot.lane.b32.xlu0 %v633, 2
    %v695 = vpop.permute.xlu0 %694
    %v697 = vsel %vm671, 0.0, %v695
    %699 = vrot.lane.b32.xlu0 %v638, 2
    %v700 = vpop.permute.xlu0 %699
    %v702 = vsel %vm671, 0.0, %v700
    %704 = vrot.lane.b32.xlu0 %v643, 2
    %v705 = vpop.permute.xlu0 %704
    %v707 = vsel %vm671, 0.0, %v705
    %709 = vrot.lane.b32.xlu0 %v648, 2
    %v710 = vpop.permute.xlu0 %709
    %v712 = vsel %vm671, 1.0, %v710
    %714 = vrot.lane.b32.xlu0 %v654, 2
    %v715 = vpop.permute.xlu0 %714
    %v717 = vsel %vm671, 0.0, %v715
    %719 = vrot.lane.b32.xlu0 %v660, 2
    %v720 = vpop.permute.xlu0 %719
    %v722 = vsel %vm671, 0.0, %v720
    %724 = vrot.lane.b32.xlu0 %v666, 2
    %v725 = vpop.permute.xlu0 %724
    %v727 = vsel %vm671, 0.0, %v725
    %v728 = vmul.f32 %v672, %v608
    %v729 = vmul.f32 %v677, %v623
    %v730 = vadd.f32 %v728, %v729
    %v731 = vmul.f32 %v682, %v638
    %v732 = vadd.f32 %v730, %v731
    %v733 = vmul.f32 %v672, %v613
    %v734 = vmul.f32 %v677, %v628
    %v735 = vadd.f32 %v733, %v734
    %v736 = vmul.f32 %v682, %v643
    %v737 = vadd.f32 %v735, %v736
    %v738 = vmul.f32 %v672, %v618
    %v739 = vmul.f32 %v677, %v633
    %v740 = vadd.f32 %v738, %v739
    %v741 = vmul.f32 %v682, %v648
    %v742 = vadd.f32 %v740, %v741
    %v743 = vmul.f32 %v687, %v608
    %v744 = vmul.f32 %v692, %v623
    %v745 = vadd.f32 %v743, %v744
    %v746 = vmul.f32 %v697, %v638
    %v747 = vadd.f32 %v745, %v746
    %v748 = vmul.f32 %v687, %v613
    %v749 = vmul.f32 %v692, %v628
    %v750 = vadd.f32 %v748, %v749
    %v751 = vmul.f32 %v697, %v643
    %v752 = vadd.f32 %v750, %v751
    %v753 = vmul.f32 %v687, %v618
    %v754 = vmul.f32 %v692, %v633
    %v755 = vadd.f32 %v753, %v754
    %v756 = vmul.f32 %v697, %v648
    %v757 = vadd.f32 %v755, %v756
    %v758 = vmul.f32 %v702, %v608
    %v759 = vmul.f32 %v707, %v623
    %v760 = vadd.f32 %v758, %v759
    %v761 = vmul.f32 %v712, %v638
    %v762 = vadd.f32 %v760, %v761
    %v763 = vmul.f32 %v702, %v613
    %v764 = vmul.f32 %v707, %v628
    %v765 = vadd.f32 %v763, %v764
    %v766 = vmul.f32 %v712, %v643
    %v767 = vadd.f32 %v765, %v766
    %v768 = vmul.f32 %v702, %v618
    %v769 = vmul.f32 %v707, %v633
    %v770 = vadd.f32 %v768, %v769
    %v771 = vmul.f32 %v712, %v648
    %v772 = vadd.f32 %v770, %v771
    %v773 = vmul.f32 %v672, %v654
    %v774 = vmul.f32 %v677, %v660
    %v775 = vadd.f32 %v773, %v774
    %v776 = vmul.f32 %v682, %v666
    %v777 = vadd.f32 %v775, %v776
    %v778 = vadd.f32 %v777, %v717
    %v779 = vmul.f32 %v687, %v654
    %v780 = vmul.f32 %v692, %v660
    %v781 = vadd.f32 %v779, %v780
    %v782 = vmul.f32 %v697, %v666
    %v783 = vadd.f32 %v781, %v782
    %v784 = vadd.f32 %v783, %v722
    %v785 = vmul.f32 %v702, %v654
    %v786 = vmul.f32 %v707, %v660
    %v787 = vadd.f32 %v785, %v786
    %v788 = vmul.f32 %v712, %v666
    %v789 = vadd.f32 %v787, %v788
    %v790 = vadd.f32 %v789, %v727
    %792 = vrot.lane.b32.xlu0 %v732, 4
    %v793 = vpop.permute.xlu0 %792
    %vm795 = vcmask 31744
    %v796 = vsel %vm795, 1.0, %v793
    %798 = vrot.lane.b32.xlu0 %v737, 4
    %v799 = vpop.permute.xlu0 %798
    %v801 = vsel %vm795, 0.0, %v799
    %803 = vrot.lane.b32.xlu0 %v742, 4
    %v804 = vpop.permute.xlu0 %803
    %v806 = vsel %vm795, 0.0, %v804
    %808 = vrot.lane.b32.xlu0 %v747, 4
    %v809 = vpop.permute.xlu0 %808
    %v811 = vsel %vm795, 0.0, %v809
    %813 = vrot.lane.b32.xlu0 %v752, 4
    %v814 = vpop.permute.xlu0 %813
    %v816 = vsel %vm795, 1.0, %v814
    %818 = vrot.lane.b32.xlu0 %v757, 4
    %v819 = vpop.permute.xlu0 %818
    %v821 = vsel %vm795, 0.0, %v819
    %823 = vrot.lane.b32.xlu0 %v762, 4
    %v824 = vpop.permute.xlu0 %823
    %v826 = vsel %vm795, 0.0, %v824
    %828 = vrot.lane.b32.xlu0 %v767, 4
    %v829 = vpop.permute.xlu0 %828
    %v831 = vsel %vm795, 0.0, %v829
    %833 = vrot.lane.b32.xlu0 %v772, 4
    %v834 = vpop.permute.xlu0 %833
    %v836 = vsel %vm795, 1.0, %v834
    %838 = vrot.lane.b32.xlu0 %v778, 4
    %v839 = vpop.permute.xlu0 %838
    %v841 = vsel %vm795, 0.0, %v839
    %843 = vrot.lane.b32.xlu0 %v784, 4
    %v844 = vpop.permute.xlu0 %843
    %v846 = vsel %vm795, 0.0, %v844
    %848 = vrot.lane.b32.xlu0 %v790, 4
    %v849 = vpop.permute.xlu0 %848
    %v851 = vsel %vm795, 0.0, %v849
    %v852 = vmul.f32 %v796, %v732
    %v853 = vmul.f32 %v801, %v747
    %v854 = vadd.f32 %v852, %v853
    %v855 = vmul.f32 %v806, %v762
    %v856 = vadd.f32 %v854, %v855
    %v857 = vmul.f32 %v796, %v737
    %v858 = vmul.f32 %v801, %v752
    %v859 = vadd.f32 %v857, %v858
    %v860 = vmul.f32 %v806, %v767
    %v861 = vadd.f32 %v859, %v860
    %v862 = vmul.f32 %v796, %v742
    %v863 = vmul.f32 %v801, %v757
    %v864 = vadd.f32 %v862, %v863
    %v865 = vmul.f32 %v806, %v772
    %v866 = vadd.f32 %v864, %v865
    %v867 = vmul.f32 %v811, %v732
    %v868 = vmul.f32 %v816, %v747
    %v869 = vadd.f32 %v867, %v868
    %v870 = vmul.f32 %v821, %v762
    %v871 = vadd.f32 %v869, %v870
    %v872 = vmul.f32 %v811, %v737
    %v873 = vmul.f32 %v816, %v752
    %v874 = vadd.f32 %v872, %v873
    %v875 = vmul.f32 %v821, %v767
    %v876 = vadd.f32 %v874, %v875
    %v877 = vmul.f32 %v811, %v742
    %v878 = vmul.f32 %v816, %v757
    %v879 = vadd.f32 %v877, %v878
    %v880 = vmul.f32 %v821, %v772
    %v881 = vadd.f32 %v879, %v880
    %v882 = vmul.f32 %v826, %v732
    %v883 = vmul.f32 %v831, %v747
    %v884 = vadd.f32 %v882, %v883
    %v885 = vmul.f32 %v836, %v762
    %v886 = vadd.f32 %v884, %v885
    %v887 = vmul.f32 %v826, %v737
    %v888 = vmul.f32 %v831, %v752
    %v889 = vadd.f32 %v887, %v888
    %v890 = vmul.f32 %v836, %v767
    %v891 = vadd.f32 %v889, %v890
    %v892 = vmul.f32 %v826, %v742
    %v893 = vmul.f32 %v831, %v757
    %v894 = vadd.f32 %v892, %v893
    %v895 = vmul.f32 %v836, %v772
    %v896 = vadd.f32 %v894, %v895
    %v897 = vmul.f32 %v796, %v778
    %v898 = vmul.f32 %v801, %v784
    %v899 = vadd.f32 %v897, %v898
    %v900 = vmul.f32 %v806, %v790
    %v901 = vadd.f32 %v899, %v900
    %v902 = vadd.f32 %v901, %v841
    %v903 = vmul.f32 %v811, %v778
    %v904 = vmul.f32 %v816, %v784
    %v905 = vadd.f32 %v903, %v904
    %v906 = vmul.f32 %v821, %v790
    %v907 = vadd.f32 %v905, %v906
    %v908 = vadd.f32 %v907, %v846
    %v909 = vmul.f32 %v826, %v778
    %v910 = vmul.f32 %v831, %v784
    %v911 = vadd.f32 %v909, %v910
    %v912 = vmul.f32 %v836, %v790
    %v913 = vadd.f32 %v911, %v912
    %v914 = vadd.f32 %v913, %v851
    %916 = vrot.lane.b32.xlu0 %v856, 1
    %v917 = vpop.permute.xlu0 %916
    %v919 = vsel %vm547, 1.0, %v917
    %921 = vrot.lane.b32.xlu0 %v861, 1
    %v922 = vpop.permute.xlu0 %921
    %v924 = vsel %vm547, 0.0, %v922
    %926 = vrot.lane.b32.xlu0 %v866, 1
    %v927 = vpop.permute.xlu0 %926
    %v929 = vsel %vm547, 0.0, %v927
    %931 = vrot.lane.b32.xlu0 %v871, 1
    %v932 = vpop.permute.xlu0 %931
    %v934 = vsel %vm547, 0.0, %v932
    %936 = vrot.lane.b32.xlu0 %v876, 1
    %v937 = vpop.permute.xlu0 %936
    %v939 = vsel %vm547, 1.0, %v937
    %941 = vrot.lane.b32.xlu0 %v881, 1
    %v942 = vpop.permute.xlu0 %941
    %v944 = vsel %vm547, 0.0, %v942
    %946 = vrot.lane.b32.xlu0 %v886, 1
    %v947 = vpop.permute.xlu0 %946
    %v949 = vsel %vm547, 0.0, %v947
    %951 = vrot.lane.b32.xlu0 %v891, 1
    %v952 = vpop.permute.xlu0 %951
    %v954 = vsel %vm547, 0.0, %v952
    %956 = vrot.lane.b32.xlu0 %v896, 1
    %v957 = vpop.permute.xlu0 %956
    %v959 = vsel %vm547, 1.0, %v957
    %961 = vrot.lane.b32.xlu0 %v902, 1
    %v962 = vpop.permute.xlu0 %961
    %v964 = vsel %vm547, 0.0, %v962
    %966 = vrot.lane.b32.xlu0 %v908, 1
    %v967 = vpop.permute.xlu0 %966
    %v969 = vsel %vm547, 0.0, %v967
    %971 = vrot.lane.b32.xlu0 %v914, 1
    %v972 = vpop.permute.xlu0 %971
    %v974 = vsel %vm547, 0.0, %v972
    %v975 = vmul.f32 %v919, %v124
    %v976 = vmul.f32 %v924, %v228
    %v977 = vadd.f32 %v975, %v976
    %v978 = vmul.f32 %v919, %v230
    %v979 = vmul.f32 %v924, %v232
    %v980 = vadd.f32 %v978, %v979
    %v981 = vmul.f32 %v929, 0.93293846
    %v982 = vadd.f32 %v980, %v981
    %v983 = vmul.f32 %v934, %v124
    %v984 = vmul.f32 %v939, %v228
    %v985 = vadd.f32 %v983, %v984
    %v986 = vmul.f32 %v934, %v230
    %v987 = vmul.f32 %v939, %v232
    %v988 = vadd.f32 %v986, %v987
    %v989 = vmul.f32 %v944, 0.93293846
    %v990 = vadd.f32 %v988, %v989
    %v991 = vmul.f32 %v949, %v124
    %v992 = vmul.f32 %v954, %v228
    %v993 = vadd.f32 %v991, %v992
    %v994 = vmul.f32 %v949, %v230
    %v995 = vmul.f32 %v954, %v232
    %v996 = vadd.f32 %v994, %v995
    %v997 = vmul.f32 %v959, 0.93293846
    %v998 = vadd.f32 %v996, %v997
    %v999 = vmul.f32 %v919, %v235
    %v1000 = vmul.f32 %v924, %v236
    %v1001 = vadd.f32 %v999, %v1000
    %v1002 = vadd.f32 %v1001, %v964
    %v1003 = vmul.f32 %v934, %v235
    %v1004 = vmul.f32 %v939, %v236
    %v1005 = vadd.f32 %v1003, %v1004
    %v1006 = vadd.f32 %v1005, %v969
    %v1007 = vmul.f32 %v949, %v235
    %v1008 = vmul.f32 %v954, %v236
    %v1009 = vadd.f32 %v1007, %v1008
    %v1010 = vadd.f32 %v1009, %v974
    %v1011 = vmul.f32 %v977, %v450
    %v1012 = vmul.f32 %v982, %v451
    %v1013 = vadd.f32 %v1011, %v1012
    %v1014 = vadd.f32 %v1013, %v1002
    %v1015 = vmul.f32 %v985, %v450
    %v1016 = vmul.f32 %v990, %v451
    %v1017 = vadd.f32 %v1015, %v1016
    %v1018 = vadd.f32 %v1017, %v1006
    %v1019 = vmul.f32 %v993, %v450
    %v1020 = vmul.f32 %v998, %v451
    %v1021 = vadd.f32 %v1019, %v1020
    %v1022 = vadd.f32 %v1021, %v1010
    %1023 = vset.pattern.permute.xlu0 0
    %1024 = vperm.xlu0 %1023, %v17
    %v1025 = vpop.permute.xlu0 %1024
    %vm1026 = vcmp.lt.s32.totalorder %v19, %v1025
    %v1027 = vsel %vm1026, %v1002, 0.0
    %1028 = vst [vmem:[#allocation2] sm:$0xff] %v1027
    %v1029 = vsel %vm1026, %v1006, 0.0
    %s1030 = scalar_lea.vmem [#allocation2], 8
    %1031 = vst [vmem:[%s1030] sm:$0xff] %v1029
    %v1032 = vsel %vm1026, %v1010, 0.0
    %s1033 = scalar_lea.vmem [#allocation2], 16
    %1034 = vst [vmem:[%s1033] sm:$0xff] %v1032
    %v1035 = vsel %vm1026, %v1014, 0.0
    %s1036 = scalar_lea.vmem [#allocation2], 24
    %1037 = vst [vmem:[%s1036] sm:$0xff] %v1035
    %v1038 = vsel %vm1026, %v1018, 0.0
    %s1039 = scalar_lea.vmem [#allocation2], 32
    %1040 = vst [vmem:[%s1039] sm:$0xff] %v1038
    %v1041 = vsel %vm1026, %v1022, 0.0
    %s1042 = scalar_lea.vmem [#allocation2], 40
    %1043 = vst [vmem:[%s1042] sm:$0xff] %v1041
    %v1044 = vsel %vm1026, %v902, 0.0
    %s1045 = scalar_lea.vmem [#allocation2], 48
    %1046 = vst [vmem:[%s1045] sm:$0xff] %v1044
    %v1047 = vsel %vm1026, %v908, 0.0
    %s1048 = scalar_lea.vmem [#allocation2], 56
    %1049 = vst [vmem:[%s1048] sm:$0xff] %v1047
    %v1050 = vsel %vm1026, %v914, 0.0
    %s1051 = scalar_lea.vmem [#allocation2], 64
    %1052 = vst [vmem:[%s1051] sm:$0xff] %v1050
    // Predicated region
    $region14: #{tpu_custom_call.1} parent=1 // pred_check
      _
    $region15: #{tpu_custom_call.1} parent=1 // pred_check_branch
      %1054 = sbr.rel (0) target = $region17
    $region16: #{tpu_custom_call.1} parent=1 // pred_region
      %s1056 = ssub.s32 1152, 1152
      %1057 = vsyncadd [#allocation3], %s1056
      %s1058 = sshll.u32 [#allocation2], 4
      %s1059 = int_to_ptr.vmem [resolvable:$true] %s1058
      %1064 = dma.vmem_to_hbm [thread:$0]  %s1059, 1152, %s3, [#allocation3], 128, 128, 8
    $region17: #{tpu_custom_call.1} parent=1 // pred_fallthru
      _
    // Predicated region
    $region18: #{tpu_custom_call.1} parent=1 // pred_check
      _
    $region19: #{tpu_custom_call.1} parent=1 // pred_check_branch
      %1066 = sbr.rel (0) target = $region21
    $region20: #{tpu_custom_call.1} parent=1 // pred_region
      %1067 = dma.done [#allocation3], 1152
    $region21: #{tpu_custom_call.1} parent=1 // pred_fallthru
      _
    %1068 = vsyncpa [#allocation3], 1

</llo_original>
